<compile_context>
chip_gen: v7x
topology: tpu7x:2x2x1
jax: 0.10.0
libtpu: 0.0.40
codegen_flags: <defaults>
</compile_context>

<pallas_src>
import jax
import jax.numpy as jnp
from jax.experimental import pallas as pl
from jax.experimental.pallas import tpu as pltpu

FEAT_SCALE = "feat_scale"


def _round_up(x, m):
    return ((x + m - 1) // m) * m


# ----------------------------------------------------------------------------
# Pallas kernel: unrolled single-layer LSTM + point head + AR generation loop
# ----------------------------------------------------------------------------
def make_deepar_kernel(H, CT, lag_seq, out_dim, hid, n_lags, max_lag):
    lag_seq = tuple(int(l) for l in lag_seq)

    def kernel(inp_ref, pt_ref, scale_ref, wg_ref, b_ref, wo_ref, bo_ref,
               yhat_ref):
        B, T, D_in = inp_ref.shape
        P = yhat_ref.shape[1]               # padded (lane-dense) output width

        # Load all weights / scale once (hoisted out of the recurrent loops).
        wg = wg_ref[...]                    # [D_in + hid, 4*hid]  (bf16)
        wo_t = wo_ref[...]                  # [out_dim, hid]       (f32)
        scale = scale_ref[...]              # [B, 1]               (f32)

        # Hoisted loop-invariant broadcasts (JAX does not CSE broadcasts).
        b_bc = jnp.broadcast_to(b_ref[...], (B, 4 * hid))     # gate bias
        bo_bc = jnp.broadcast_to(bo_ref[...], (B, out_dim))   # head bias

        # Register-carried recurrent state.
        h = jnp.zeros((B, hid), jnp.float32)
        c = jnp.zeros((B, hid), jnp.float32)

        def lstm_step(x, h, c):
            # fused gate matmul: one bf16 MXU push per step, f32 accumulation
            xh = jnp.concatenate([x, h], axis=1).astype(jnp.bfloat16)
            g = jnp.dot(xh, wg, preferred_element_type=jnp.float32) + b_bc
            i = jax.nn.sigmoid(g[:, 0 * hid:1 * hid])
            f = jax.nn.sigmoid(g[:, 1 * hid:2 * hid])
            gg = jnp.tanh(g[:, 2 * hid:3 * hid])
            o = jax.nn.sigmoid(g[:, 3 * hid:4 * hid])
            c_new = f * c + i * gg
            h_new = o * jnp.tanh(c_new)
            return h_new, c_new

        if out_dim == 1:
            # VPU multiply + XLU reduce -- keeps the MXU slot free.
            wo_bc = jnp.broadcast_to(wo_t, (B, hid))           # hoisted

            def head(hv):
                return jnp.sum(hv * wo_bc, axis=-1, keepdims=True) + bo_bc
        else:
            wo_bf = wo_t.astype(jnp.bfloat16)

            def head(hv):
                return jax.lax.dot_general(
                    hv.astype(jnp.bfloat16), wo_bf,
                    (((1,), (1,)), ((), ())),
                    preferred_element_type=jnp.float32) + bo_bc

        outs = []          # per-step [B, out_dim] (unscaled) outputs
        last_out = None

        # -------- context (teacher-forced) part --------
        for t in range(CT):
            x_t = inp_ref[:, t, :]                             # [B, D_in]
            h, c = lstm_step(x_t, h, c)
            out_t = head(h)
            outs.append(out_t)
            last_out = out_t

        # -------- autoregressive generation part --------
        if H > 1:
            # hoisted static column masks (iota compares not CSE'd by JAX)
            lane = jax.lax.broadcasted_iota(jnp.int32, (B, D_in), 1)
            mask_tgt = lane == 0
            mask_lag = [lane == (D_in - n_lags + j) for j in range(n_lags)]

            # Preload (once, off the serial path) the head of the scaled
            # past-target history needed for lag features.
            pt_cols = [pt_ref[:, k:k + 1] for k in range(max_lag)]

            pred_hist = []   # most-recent-first list of [B, 1] predictions
            for t in range(H - 1):
                prev = last_out[:, 0:1]
                pred_hist.insert(0, prev)
                base = inp_ref[:, CT + t, :]
                x_t = jnp.where(mask_tgt, prev, base)
                for j, L in enumerate(lag_seq):
                    if L < len(pred_hist):
                        lv = pred_hist[L]
                    else:
                        lv = pt_cols[L - len(pred_hist)]
                    x_t = jnp.where(mask_lag[j], lv, x_t)
                h, c = lstm_step(x_t, h, c)
                out_t = head(h)
                outs.append(out_t)
                last_out = out_t

        # Single lane-dense (128-aligned, unmasked) store, scaled by
        # target_scale.  Steps beyond CT+H-1 (if any) stay zero, matching the
        # torch.zeros-initialized y_hat in the reference module.
        y = jnp.concatenate(outs, axis=1)                      # [B, n_valid]
        if P > y.shape[1]:
            y = jnp.concatenate(
                [y, jnp.zeros((B, P - y.shape[1]), jnp.float32)], axis=1)
        yhat_ref[...] = y * scale

    return kernel


# ----------------------------------------------------------------------------
# Plain-JAX glue: replicates DeepARPoint.forward preprocessing exactly
# ----------------------------------------------------------------------------
def _prepare_inputs(X, pad_mask, H, context_length, max_lag, lag_seq,
                    scaled_features):
    X = jnp.asarray(X, jnp.float32)
    pad_mask = jnp.asarray(pad_mask, jnp.float32)
    if H > 0:
        h = H - 1
        if h > 0:
            X = X.at[:, -h:, 0].set(0.0)
            past_target = X[:, :-h, 0][:, ::-1]
        else:
            past_target = X[:, :, 0][:, ::-1]
    else:
        past_target = X[:, :, 0][:, ::-1]
    X = X[:, max_lag:, :]
    pad_mask = pad_mask[:, max_lag:]
    B, T, C = X.shape

    # TODO(synk): scaling_fn is an injected callable in the original module;
    # a masked mean-|target| scaler (clamped) is assumed here.
    ctx_t = X[:, :context_length, 0]
    ctx_m = pad_mask[:, :context_length]
    denom = jnp.maximum(jnp.sum(ctx_m, axis=1), 1.0)
    scale = jnp.maximum(jnp.sum(jnp.abs(ctx_t) * ctx_m, axis=1) / denom, 1e-3)
    target_scale = scale[:, None, None]                      # [B, 1, 1]

    X = X.at[:, :, :1].set(X[:, :, :1] / target_scale)
    past_target = past_target / target_scale[:, :, 0]

    # create_lags(context_length, past_target, lag_seq)
    lag_m1 = jnp.asarray(lag_seq, jnp.int32) - 1
    lag_feats = []
    for t in range(context_length):
        lag_feats.append(past_target[:, lag_m1 + (t + 1)])
    lags = jnp.stack(lag_feats, axis=1)[:, ::-1, :]          # [B, CT, n_lags]

    if FEAT_SCALE in scaled_features:
        logs = jnp.broadcast_to(jnp.log(target_scale[:, :, :1]), (B, T, 1))
        X = jnp.concatenate([X, logs], axis=2)
        C = C + 1

    n_lags = len(lag_seq)
    inp = jnp.zeros((B, T, C + n_lags), jnp.float32)
    inp = inp.at[:, :, :C].set(X)
    inp = inp.at[:, :context_length, C:].set(lags)
    return inp, past_target, scale


def deepar_point_forward(X, pad_mask, H, context_length, *, max_lag, lag_seq,
                         output_dim, scaled_features, weights,
                         batch_block=None):
    wih, whh, b, wo, bo = weights
    hid = whh.shape[0]
    inp, past_target, scale = _prepare_inputs(
        X, pad_mask, H, context_length, max_lag, lag_seq, scaled_features)
    B, T, D_in = inp.shape
    n_lags = len(lag_seq)

    # Fused gate weights, cast to bf16 once (MXU-native; f32 accumulation).
    w_gates = jnp.concatenate([jnp.asarray(wih, jnp.float32),
                               jnp.asarray(whh, jnp.float32)],
                              axis=0).astype(jnp.bfloat16)   # [D_in+hid, 4*hid]
    wo_t = jnp.asarray(wo, jnp.float32).T                    # [out_dim, hid]
    b = jnp.asarray(b, jnp.float32)
    bo = jnp.asarray(bo, jnp.float32)
    pt_head = past_target[:, :max_lag]                       # [B, max_lag]
    scale2 = scale[:, None]                                  # [B, 1]

    # Lane-dense padded output width (unmasked 128-wide stores).
    P = max(_round_up(T * output_dim, 128), 128)

    # Batch tile: shard batch across the grid (parallel => megacore on v7x).
    # NOTE: for throughput the caller should batch >= 8 (ideally 128+) series.
    if batch_block is None:
        batch_block = B if (B < 8 or B % 8 != 0) else min(B, 64)
    TB = batch_block
    grid = (pl.cdiv(B, TB),)

    # TODO(synk): UnrolledLSTMDecoder internals are not shown; a single-layer
    # standard LSTM with zero initial state is assumed.
    kernel = make_deepar_kernel(H, context_length, lag_seq, output_dim, hid,
                                n_lags, max_lag)

    yhat_pad = pl.pallas_call(
        kernel,
        out_shape=jax.ShapeDtypeStruct((B, P), jnp.float32),
        grid=grid,
        in_specs=[
            pl.BlockSpec((TB, T, D_in), lambda i: (i, 0, 0)),
            pl.BlockSpec((TB, max_lag), lambda i: (i, 0)),
            pl.BlockSpec((TB, 1), lambda i: (i, 0)),
            pl.BlockSpec(w_gates.shape, lambda i: (0, 0)),
            pl.BlockSpec(b.shape, lambda i: (0, 0)),
            pl.BlockSpec(wo_t.shape, lambda i: (0, 0)),
            pl.BlockSpec(bo.shape, lambda i: (0, 0)),
        ],
        out_specs=pl.BlockSpec((TB, P), lambda i: (i, 0)),
        compiler_params=pltpu.CompilerParams(
            dimension_semantics=("parallel",),
            vmem_limit_bytes=32 * 1024 * 1024),
    )(inp, pt_head, scale2, w_gates, b, wo_t, bo)
    return yhat_pad[:, :T * output_dim].reshape(B, T, output_dim)


# ----------------------------------------------------------------------------
# Pure-JAX reference (same numerics: bf16 gate matmuls, f32 accumulation)
# ----------------------------------------------------------------------------
def _reference_decode(inp, past_target, scale, H, CT, lag_seq, out_dim,
                      weights):
    wih, whh, b, wo, bo = weights
    hid = whh.shape[0]
    B, T, D_in = inp.shape
    n_lags = len(lag_seq)
    wih_bf = jnp.asarray(wih).astype(jnp.bfloat16)
    whh_bf = jnp.asarray(whh).astype(jnp.bfloat16)
    h = jnp.zeros((B, hid), jnp.float32)
    c = jnp.zeros((B, hid), jnp.float32)
    yhat = jnp.zeros((B, T, out_dim), jnp.float32)

    def step(x, h, c):
        g = (jnp.dot(x.astype(jnp.bfloat16), wih_bf,
                     preferred_element_type=jnp.float32)
             + jnp.dot(h.astype(jnp.bfloat16), whh_bf,
                       preferred_element_type=jnp.float32)
             + b)
        i = jax.nn.sigmoid(g[:, :hid])
        f = jax.nn.sigmoid(g[:, hid:2 * hid])
        gg = jnp.tanh(g[:, 2 * hid:3 * hid])
        o = jax.nn.sigmoid(g[:, 3 * hid:])
        c = f * c + i * gg
        h = o * jnp.tanh(c)
        return h, c

    def head(hv):
        return jnp.sum(hv[:, :, None] * wo[None, :, :], axis=1) + bo

    last = None
    pt = past_target
    lag_idx = jnp.asarray(lag_seq, jnp.int32)
    for t in range(CT):
        h, c = step(inp[:, t, :], h, c)
        out = head(h)
        yhat = yhat.at[:, t, :].set(out)
        last = out
    for t in range(H - 1):
        pt = jnp.concatenate([last[:, 0:1], pt], axis=1)
        lagv = pt[:, lag_idx]
        x = inp[:, CT + t, :]
        x = x.at[:, 0].set(last[:, 0])
        x = x.at[:, D_in - n_lags:].set(lagv)
        h, c = step(x, h, c)
        out = head(h)
        yhat = yhat.at[:, CT + t, :].set(out)
        last = out
    return yhat * scale[:, None, None]


# ----------------------------------------------------------------------------
if __name__ == "__main__":
    key = jax.random.PRNGKey(0)
    B, CT, H = 2, 12, 5
    lag_seq = [1, 2, 4, 7]
    max_lag = max(lag_seq)
    output_dim = 1
    hidden_dim = 32
    C_in = 3  # target + 2 covariates
    scaled_features = ["target", "cov1", "cov2", FEAT_SCALE]
    T_full = max_lag + CT + H - 1  # 23
    n_lags = len(lag_seq)
    D_in = C_in + 1 + n_lags       # n_scaled_features + n_lags = 8

    ks = jax.random.split(key, 6)
    X = jax.random.normal(ks[0], (B, T_full, C_in), jnp.float32)
    pad_mask = jnp.ones((B, T_full), jnp.float32)
    wih = 0.1 * jax.random.normal(ks[1], (D_in, 4 * hidden_dim), jnp.float32)
    whh = 0.1 * jax.random.normal(ks[2], (hidden_dim, 4 * hidden_dim), jnp.float32)
    b = 0.1 * jax.random.normal(ks[3], (1, 4 * hidden_dim), jnp.float32)
    wo = 0.1 * jax.random.normal(ks[4], (hidden_dim, output_dim), jnp.float32)
    bo = 0.1 * jax.random.normal(ks[5], (1, output_dim), jnp.float32)
    weights = (wih, whh, b, wo, bo)

    y_hat = deepar_point_forward(
        X, pad_mask, H, CT, max_lag=max_lag, lag_seq=lag_seq,
        output_dim=output_dim, scaled_features=scaled_features, weights=weights)
    y_hat = jax.block_until_ready(y_hat)

    # correctness check against a pure-JAX reference with matched numerics
    inp, past_target, scale = _prepare_inputs(
        X, pad_mask, H, CT, max_lag, lag_seq, scaled_features)
    y_ref = _reference_decode(inp, past_target, scale, H, CT, lag_seq,
                              output_dim, weights)
    assert y_hat.shape == (B, T_full - max_lag, output_dim)
    assert jnp.allclose(y_hat, y_ref, rtol=2e-3, atol=2e-3), (
        "kernel/reference mismatch: max abs err "
        f"{float(jnp.max(jnp.abs(y_hat - y_ref)))}")

    print("KERNEL_OK")
</pallas_src>

<mosaic_0001>
module attributes {stable_mosaic.version = 11 : i64} {
  func.func @kernel(%arg0: i32, %arg1: memref<2x16x8xf32, #tpu.memory_space<vmem>>, %arg2: memref<2x7xf32, #tpu.memory_space<vmem>>, %arg3: memref<2x1xf32, #tpu.memory_space<vmem>>, %arg4: memref<40x128xbf16, #tpu.memory_space<vmem>>, %arg5: memref<1x128xf32, #tpu.memory_space<vmem>>, %arg6: memref<1x32xf32, #tpu.memory_space<vmem>>, %arg7: memref<1x1xf32, #tpu.memory_space<vmem>>, %arg8: memref<2x128xf32, #tpu.memory_space<vmem>>) attributes {dimension_semantics = [#tpu.dimension_semantics<parallel>], iteration_bounds = array<i64: 1>, scalar_prefetch = 0 : i64, scratch_operands = 0 : i64, tpu.core_type = #tpu.core_type<tc>, window_params = [{transform_indices = @transform_0, window_bounds = array<i64: 2, 16, 8>}, {transform_indices = @transform_1, window_bounds = array<i64: 2, 7>}, {transform_indices = @transform_2, window_bounds = array<i64: 2, 1>}, {pipeline_mode = #tpu.pipeline_mode<synchronous>, transform_indices = @transform_3, window_bounds = array<i64: 40, 128>}, {pipeline_mode = #tpu.pipeline_mode<synchronous>, transform_indices = @transform_4, window_bounds = array<i64: 1, 128>}, {pipeline_mode = #tpu.pipeline_mode<synchronous>, transform_indices = @transform_5, window_bounds = array<i64: 1, 32>}, {pipeline_mode = #tpu.pipeline_mode<synchronous>, transform_indices = @transform_6, window_bounds = array<i64: 1, 1>}, {transform_indices = @transform_7, window_bounds = array<i64: 2, 128>}]} {
    %c0 = arith.constant 0 : index
    %c0_0 = arith.constant 0 : index
    %0 = vector.load %arg4[%c0, %c0_0] : memref<40x128xbf16, #tpu.memory_space<vmem>>, vector<40x128xbf16>
    %c0_1 = arith.constant 0 : index
    %c0_2 = arith.constant 0 : index
    %1 = vector.load %arg6[%c0_1, %c0_2] : memref<1x32xf32, #tpu.memory_space<vmem>>, vector<1x32xf32>
    %c0_3 = arith.constant 0 : index
    %c0_4 = arith.constant 0 : index
    %2 = vector.load %arg3[%c0_3, %c0_4] : memref<2x1xf32, #tpu.memory_space<vmem>>, vector<2x1xf32>
    %c0_5 = arith.constant 0 : index
    %c0_6 = arith.constant 0 : index
    %3 = vector.load %arg5[%c0_5, %c0_6] : memref<1x128xf32, #tpu.memory_space<vmem>>, vector<1x128xf32>
    %4 = vector.shape_cast %3 : vector<1x128xf32> to vector<1x128xf32>
    %5 = vector.broadcast %4 : vector<1x128xf32> to vector<2x128xf32>
    %c0_7 = arith.constant 0 : index
    %c0_8 = arith.constant 0 : index
    %6 = vector.load %arg7[%c0_7, %c0_8] : memref<1x1xf32, #tpu.memory_space<vmem>>, vector<1x1xf32>
    %7 = vector.shape_cast %6 : vector<1x1xf32> to vector<1x1xf32>
    %8 = vector.broadcast %7 : vector<1x1xf32> to vector<2x1xf32>
    %cst = arith.constant 0.000000e+00 : f32
    %9 = vector.broadcast %cst : f32 to vector<2x32xf32>
    %cst_9 = arith.constant 0.000000e+00 : f32
    %10 = vector.broadcast %cst_9 : f32 to vector<2x32xf32>
    %11 = vector.shape_cast %1 : vector<1x32xf32> to vector<1x32xf32>
    %12 = vector.broadcast %11 : vector<1x32xf32> to vector<2x32xf32>
    %c0_10 = arith.constant 0 : index
    %c0_11 = arith.constant 0 : index
    %c0_12 = arith.constant 0 : index
    %13 = vector.load %arg1[%c0_10, %c0_11, %c0_12] : memref<2x16x8xf32, #tpu.memory_space<vmem>>, vector<2x1x8xf32>
    %14 = vector.shape_cast %13 : vector<2x1x8xf32> to vector<2x8xf32>
    %15 = tpu.concatenate %14, %9 in 1 : vector<2x8xf32>, vector<2x32xf32> -> vector<2x40xf32>
    %16 = arith.truncf %15 : vector<2x40xf32> to vector<2x40xbf16>
    %cst_13 = arith.constant dense<0.000000e+00> : vector<2x128xf32>
    %17 = tpu.matmul %16, %0, %cst_13 {dimension_numbers = #tpu.dot_dimension_numbers<[1], [0], [0], [1], [0, 0, 1, 1], [], []>} : vector<2x40xbf16>, vector<40x128xbf16>, vector<2x128xf32> -> vector<2x128xf32>
    %18 = arith.addf %17, %5 : vector<2x128xf32>
    %19 = vector.extract_strided_slice %18 {offsets = [0, 0], sizes = [2, 32], strides = [1, 1]} : vector<2x128xf32> to vector<2x32xf32>
    %20 = arith.negf %19 : vector<2x32xf32>
    %21 = math.exp %20 : vector<2x32xf32>
    %cst_14 = arith.constant 1.000000e+00 : f32
    %22 = vector.broadcast %cst_14 : f32 to vector<2x32xf32>
    %23 = arith.addf %22, %21 : vector<2x32xf32>
    %24 = arith.divf %22, %23 : vector<2x32xf32>
    %25 = vector.extract_strided_slice %18 {offsets = [0, 32], sizes = [2, 32], strides = [1, 1]} : vector<2x128xf32> to vector<2x32xf32>
    %26 = arith.negf %25 : vector<2x32xf32>
    %27 = math.exp %26 : vector<2x32xf32>
    %cst_15 = arith.constant 1.000000e+00 : f32
    %28 = vector.broadcast %cst_15 : f32 to vector<2x32xf32>
    %29 = arith.addf %28, %27 : vector<2x32xf32>
    %30 = arith.divf %28, %29 : vector<2x32xf32>
    %31 = vector.extract_strided_slice %18 {offsets = [0, 64], sizes = [2, 32], strides = [1, 1]} : vector<2x128xf32> to vector<2x32xf32>
    %32 = math.tanh %31 : vector<2x32xf32>
    %33 = vector.extract_strided_slice %18 {offsets = [0, 96], sizes = [2, 32], strides = [1, 1]} : vector<2x128xf32> to vector<2x32xf32>
    %34 = arith.negf %33 : vector<2x32xf32>
    %35 = math.exp %34 : vector<2x32xf32>
    %cst_16 = arith.constant 1.000000e+00 : f32
    %36 = vector.broadcast %cst_16 : f32 to vector<2x32xf32>
    %37 = arith.addf %36, %35 : vector<2x32xf32>
    %38 = arith.divf %36, %37 : vector<2x32xf32>
    %39 = arith.mulf %30, %10 : vector<2x32xf32>
    %40 = arith.mulf %24, %32 : vector<2x32xf32>
    %41 = arith.addf %39, %40 : vector<2x32xf32>
    %42 = math.tanh %41 : vector<2x32xf32>
    %43 = arith.mulf %38, %42 : vector<2x32xf32>
    %44 = arith.mulf %43, %12 : vector<2x32xf32>
    %cst_17 = arith.constant dense<0.000000e+00> : vector<2xf32>
    %45 = vector.multi_reduction <add>, %44, %cst_17 [1] : vector<2x32xf32> to vector<2xf32>
    %46 = vector.shape_cast %45 : vector<2xf32> to vector<2x1xf32>
    %47 = arith.addf %46, %8 : vector<2x1xf32>
    %c0_18 = arith.constant 0 : index
    %c1 = arith.constant 1 : index
    %c0_19 = arith.constant 0 : index
    %48 = vector.load %arg1[%c0_18, %c1, %c0_19] : memref<2x16x8xf32, #tpu.memory_space<vmem>>, vector<2x1x8xf32>
    %49 = vector.shape_cast %48 : vector<2x1x8xf32> to vector<2x8xf32>
    %50 = tpu.concatenate %49, %43 in 1 : vector<2x8xf32>, vector<2x32xf32> -> vector<2x40xf32>
    %51 = arith.truncf %50 : vector<2x40xf32> to vector<2x40xbf16>
    %cst_20 = arith.constant dense<0.000000e+00> : vector<2x128xf32>
    %52 = tpu.matmul %51, %0, %cst_20 {dimension_numbers = #tpu.dot_dimension_numbers<[1], [0], [0], [1], [0, 0, 1, 1], [], []>} : vector<2x40xbf16>, vector<40x128xbf16>, vector<2x128xf32> -> vector<2x128xf32>
    %53 = arith.addf %52, %5 : vector<2x128xf32>
    %54 = vector.extract_strided_slice %53 {offsets = [0, 0], sizes = [2, 32], strides = [1, 1]} : vector<2x128xf32> to vector<2x32xf32>
    %55 = arith.negf %54 : vector<2x32xf32>
    %56 = math.exp %55 : vector<2x32xf32>
    %cst_21 = arith.constant 1.000000e+00 : f32
    %57 = vector.broadcast %cst_21 : f32 to vector<2x32xf32>
    %58 = arith.addf %57, %56 : vector<2x32xf32>
    %59 = arith.divf %57, %58 : vector<2x32xf32>
    %60 = vector.extract_strided_slice %53 {offsets = [0, 32], sizes = [2, 32], strides = [1, 1]} : vector<2x128xf32> to vector<2x32xf32>
    %61 = arith.negf %60 : vector<2x32xf32>
    %62 = math.exp %61 : vector<2x32xf32>
    %cst_22 = arith.constant 1.000000e+00 : f32
    %63 = vector.broadcast %cst_22 : f32 to vector<2x32xf32>
    %64 = arith.addf %63, %62 : vector<2x32xf32>
    %65 = arith.divf %63, %64 : vector<2x32xf32>
    %66 = vector.extract_strided_slice %53 {offsets = [0, 64], sizes = [2, 32], strides = [1, 1]} : vector<2x128xf32> to vector<2x32xf32>
    %67 = math.tanh %66 : vector<2x32xf32>
    %68 = vector.extract_strided_slice %53 {offsets = [0, 96], sizes = [2, 32], strides = [1, 1]} : vector<2x128xf32> to vector<2x32xf32>
    %69 = arith.negf %68 : vector<2x32xf32>
    %70 = math.exp %69 : vector<2x32xf32>
    %cst_23 = arith.constant 1.000000e+00 : f32
    %71 = vector.broadcast %cst_23 : f32 to vector<2x32xf32>
    %72 = arith.addf %71, %70 : vector<2x32xf32>
    %73 = arith.divf %71, %72 : vector<2x32xf32>
    %74 = arith.mulf %65, %41 : vector<2x32xf32>
    %75 = arith.mulf %59, %67 : vector<2x32xf32>
    %76 = arith.addf %74, %75 : vector<2x32xf32>
    %77 = math.tanh %76 : vector<2x32xf32>
    %78 = arith.mulf %73, %77 : vector<2x32xf32>
    %79 = arith.mulf %78, %12 : vector<2x32xf32>
    %cst_24 = arith.constant dense<0.000000e+00> : vector<2xf32>
    %80 = vector.multi_reduction <add>, %79, %cst_24 [1] : vector<2x32xf32> to vector<2xf32>
    %81 = vector.shape_cast %80 : vector<2xf32> to vector<2x1xf32>
    %82 = arith.addf %81, %8 : vector<2x1xf32>
    %c0_25 = arith.constant 0 : index
    %c2 = arith.constant 2 : index
    %c0_26 = arith.constant 0 : index
    %83 = vector.load %arg1[%c0_25, %c2, %c0_26] : memref<2x16x8xf32, #tpu.memory_space<vmem>>, vector<2x1x8xf32>
    %84 = vector.shape_cast %83 : vector<2x1x8xf32> to vector<2x8xf32>
    %85 = tpu.concatenate %84, %78 in 1 : vector<2x8xf32>, vector<2x32xf32> -> vector<2x40xf32>
    %86 = arith.truncf %85 : vector<2x40xf32> to vector<2x40xbf16>
    %cst_27 = arith.constant dense<0.000000e+00> : vector<2x128xf32>
    %87 = tpu.matmul %86, %0, %cst_27 {dimension_numbers = #tpu.dot_dimension_numbers<[1], [0], [0], [1], [0, 0, 1, 1], [], []>} : vector<2x40xbf16>, vector<40x128xbf16>, vector<2x128xf32> -> vector<2x128xf32>
    %88 = arith.addf %87, %5 : vector<2x128xf32>
    %89 = vector.extract_strided_slice %88 {offsets = [0, 0], sizes = [2, 32], strides = [1, 1]} : vector<2x128xf32> to vector<2x32xf32>
    %90 = arith.negf %89 : vector<2x32xf32>
    %91 = math.exp %90 : vector<2x32xf32>
    %cst_28 = arith.constant 1.000000e+00 : f32
    %92 = vector.broadcast %cst_28 : f32 to vector<2x32xf32>
    %93 = arith.addf %92, %91 : vector<2x32xf32>
    %94 = arith.divf %92, %93 : vector<2x32xf32>
    %95 = vector.extract_strided_slice %88 {offsets = [0, 32], sizes = [2, 32], strides = [1, 1]} : vector<2x128xf32> to vector<2x32xf32>
    %96 = arith.negf %95 : vector<2x32xf32>
    %97 = math.exp %96 : vector<2x32xf32>
    %cst_29 = arith.constant 1.000000e+00 : f32
    %98 = vector.broadcast %cst_29 : f32 to vector<2x32xf32>
    %99 = arith.addf %98, %97 : vector<2x32xf32>
    %100 = arith.divf %98, %99 : vector<2x32xf32>
    %101 = vector.extract_strided_slice %88 {offsets = [0, 64], sizes = [2, 32], strides = [1, 1]} : vector<2x128xf32> to vector<2x32xf32>
    %102 = math.tanh %101 : vector<2x32xf32>
    %103 = vector.extract_strided_slice %88 {offsets = [0, 96], sizes = [2, 32], strides = [1, 1]} : vector<2x128xf32> to vector<2x32xf32>
    %104 = arith.negf %103 : vector<2x32xf32>
    %105 = math.exp %104 : vector<2x32xf32>
    %cst_30 = arith.constant 1.000000e+00 : f32
    %106 = vector.broadcast %cst_30 : f32 to vector<2x32xf32>
    %107 = arith.addf %106, %105 : vector<2x32xf32>
    %108 = arith.divf %106, %107 : vector<2x32xf32>
    %109 = arith.mulf %100, %76 : vector<2x32xf32>
    %110 = arith.mulf %94, %102 : vector<2x32xf32>
    %111 = arith.addf %109, %110 : vector<2x32xf32>
    %112 = math.tanh %111 : vector<2x32xf32>
    %113 = arith.mulf %108, %112 : vector<2x32xf32>
    %114 = arith.mulf %113, %12 : vector<2x32xf32>
    %cst_31 = arith.constant dense<0.000000e+00> : vector<2xf32>
    %115 = vector.multi_reduction <add>, %114, %cst_31 [1] : vector<2x32xf32> to vector<2xf32>
    %116 = vector.shape_cast %115 : vector<2xf32> to vector<2x1xf32>
    %117 = arith.addf %116, %8 : vector<2x1xf32>
    %c0_32 = arith.constant 0 : index
    %c3 = arith.constant 3 : index
    %c0_33 = arith.constant 0 : index
    %118 = vector.load %arg1[%c0_32, %c3, %c0_33] : memref<2x16x8xf32, #tpu.memory_space<vmem>>, vector<2x1x8xf32>
    %119 = vector.shape_cast %118 : vector<2x1x8xf32> to vector<2x8xf32>
    %120 = tpu.concatenate %119, %113 in 1 : vector<2x8xf32>, vector<2x32xf32> -> vector<2x40xf32>
    %121 = arith.truncf %120 : vector<2x40xf32> to vector<2x40xbf16>
    %cst_34 = arith.constant dense<0.000000e+00> : vector<2x128xf32>
    %122 = tpu.matmul %121, %0, %cst_34 {dimension_numbers = #tpu.dot_dimension_numbers<[1], [0], [0], [1], [0, 0, 1, 1], [], []>} : vector<2x40xbf16>, vector<40x128xbf16>, vector<2x128xf32> -> vector<2x128xf32>
    %123 = arith.addf %122, %5 : vector<2x128xf32>
    %124 = vector.extract_strided_slice %123 {offsets = [0, 0], sizes = [2, 32], strides = [1, 1]} : vector<2x128xf32> to vector<2x32xf32>
    %125 = arith.negf %124 : vector<2x32xf32>
    %126 = math.exp %125 : vector<2x32xf32>
    %cst_35 = arith.constant 1.000000e+00 : f32
    %127 = vector.broadcast %cst_35 : f32 to vector<2x32xf32>
    %128 = arith.addf %127, %126 : vector<2x32xf32>
    %129 = arith.divf %127, %128 : vector<2x32xf32>
    %130 = vector.extract_strided_slice %123 {offsets = [0, 32], sizes = [2, 32], strides = [1, 1]} : vector<2x128xf32> to vector<2x32xf32>
    %131 = arith.negf %130 : vector<2x32xf32>
    %132 = math.exp %131 : vector<2x32xf32>
    %cst_36 = arith.constant 1.000000e+00 : f32
    %133 = vector.broadcast %cst_36 : f32 to vector<2x32xf32>
    %134 = arith.addf %133, %132 : vector<2x32xf32>
    %135 = arith.divf %133, %134 : vector<2x32xf32>
    %136 = vector.extract_strided_slice %123 {offsets = [0, 64], sizes = [2, 32], strides = [1, 1]} : vector<2x128xf32> to vector<2x32xf32>
    %137 = math.tanh %136 : vector<2x32xf32>
    %138 = vector.extract_strided_slice %123 {offsets = [0, 96], sizes = [2, 32], strides = [1, 1]} : vector<2x128xf32> to vector<2x32xf32>
    %139 = arith.negf %138 : vector<2x32xf32>
    %140 = math.exp %139 : vector<2x32xf32>
    %cst_37 = arith.constant 1.000000e+00 : f32
    %141 = vector.broadcast %cst_37 : f32 to vector<2x32xf32>
    %142 = arith.addf %141, %140 : vector<2x32xf32>
    %143 = arith.divf %141, %142 : vector<2x32xf32>
    %144 = arith.mulf %135, %111 : vector<2x32xf32>
    %145 = arith.mulf %129, %137 : vector<2x32xf32>
    %146 = arith.addf %144, %145 : vector<2x32xf32>
    %147 = math.tanh %146 : vector<2x32xf32>
    %148 = arith.mulf %143, %147 : vector<2x32xf32>
    %149 = arith.mulf %148, %12 : vector<2x32xf32>
    %cst_38 = arith.constant dense<0.000000e+00> : vector<2xf32>
    %150 = vector.multi_reduction <add>, %149, %cst_38 [1] : vector<2x32xf32> to vector<2xf32>
    %151 = vector.shape_cast %150 : vector<2xf32> to vector<2x1xf32>
    %152 = arith.addf %151, %8 : vector<2x1xf32>
    %c0_39 = arith.constant 0 : index
    %c4 = arith.constant 4 : index
    %c0_40 = arith.constant 0 : index
    %153 = vector.load %arg1[%c0_39, %c4, %c0_40] : memref<2x16x8xf32, #tpu.memory_space<vmem>>, vector<2x1x8xf32>
    %154 = vector.shape_cast %153 : vector<2x1x8xf32> to vector<2x8xf32>
    %155 = tpu.concatenate %154, %148 in 1 : vector<2x8xf32>, vector<2x32xf32> -> vector<2x40xf32>
    %156 = arith.truncf %155 : vector<2x40xf32> to vector<2x40xbf16>
    %cst_41 = arith.constant dense<0.000000e+00> : vector<2x128xf32>
    %157 = tpu.matmul %156, %0, %cst_41 {dimension_numbers = #tpu.dot_dimension_numbers<[1], [0], [0], [1], [0, 0, 1, 1], [], []>} : vector<2x40xbf16>, vector<40x128xbf16>, vector<2x128xf32> -> vector<2x128xf32>
    %158 = arith.addf %157, %5 : vector<2x128xf32>
    %159 = vector.extract_strided_slice %158 {offsets = [0, 0], sizes = [2, 32], strides = [1, 1]} : vector<2x128xf32> to vector<2x32xf32>
    %160 = arith.negf %159 : vector<2x32xf32>
    %161 = math.exp %160 : vector<2x32xf32>
    %cst_42 = arith.constant 1.000000e+00 : f32
    %162 = vector.broadcast %cst_42 : f32 to vector<2x32xf32>
    %163 = arith.addf %162, %161 : vector<2x32xf32>
    %164 = arith.divf %162, %163 : vector<2x32xf32>
    %165 = vector.extract_strided_slice %158 {offsets = [0, 32], sizes = [2, 32], strides = [1, 1]} : vector<2x128xf32> to vector<2x32xf32>
    %166 = arith.negf %165 : vector<2x32xf32>
    %167 = math.exp %166 : vector<2x32xf32>
    %cst_43 = arith.constant 1.000000e+00 : f32
    %168 = vector.broadcast %cst_43 : f32 to vector<2x32xf32>
    %169 = arith.addf %168, %167 : vector<2x32xf32>
    %170 = arith.divf %168, %169 : vector<2x32xf32>
    %171 = vector.extract_strided_slice %158 {offsets = [0, 64], sizes = [2, 32], strides = [1, 1]} : vector<2x128xf32> to vector<2x32xf32>
    %172 = math.tanh %171 : vector<2x32xf32>
    %173 = vector.extract_strided_slice %158 {offsets = [0, 96], sizes = [2, 32], strides = [1, 1]} : vector<2x128xf32> to vector<2x32xf32>
    %174 = arith.negf %173 : vector<2x32xf32>
    %175 = math.exp %174 : vector<2x32xf32>
    %cst_44 = arith.constant 1.000000e+00 : f32
    %176 = vector.broadcast %cst_44 : f32 to vector<2x32xf32>
    %177 = arith.addf %176, %175 : vector<2x32xf32>
    %178 = arith.divf %176, %177 : vector<2x32xf32>
    %179 = arith.mulf %170, %146 : vector<2x32xf32>
    %180 = arith.mulf %164, %172 : vector<2x32xf32>
    %181 = arith.addf %179, %180 : vector<2x32xf32>
    %182 = math.tanh %181 : vector<2x32xf32>
    %183 = arith.mulf %178, %182 : vector<2x32xf32>
    %184 = arith.mulf %183, %12 : vector<2x32xf32>
    %cst_45 = arith.constant dense<0.000000e+00> : vector<2xf32>
    %185 = vector.multi_reduction <add>, %184, %cst_45 [1] : vector<2x32xf32> to vector<2xf32>
    %186 = vector.shape_cast %185 : vector<2xf32> to vector<2x1xf32>
    %187 = arith.addf %186, %8 : vector<2x1xf32>
    %c0_46 = arith.constant 0 : index
    %c5 = arith.constant 5 : index
    %c0_47 = arith.constant 0 : index
    %188 = vector.load %arg1[%c0_46, %c5, %c0_47] : memref<2x16x8xf32, #tpu.memory_space<vmem>>, vector<2x1x8xf32>
    %189 = vector.shape_cast %188 : vector<2x1x8xf32> to vector<2x8xf32>
    %190 = tpu.concatenate %189, %183 in 1 : vector<2x8xf32>, vector<2x32xf32> -> vector<2x40xf32>
    %191 = arith.truncf %190 : vector<2x40xf32> to vector<2x40xbf16>
    %cst_48 = arith.constant dense<0.000000e+00> : vector<2x128xf32>
    %192 = tpu.matmul %191, %0, %cst_48 {dimension_numbers = #tpu.dot_dimension_numbers<[1], [0], [0], [1], [0, 0, 1, 1], [], []>} : vector<2x40xbf16>, vector<40x128xbf16>, vector<2x128xf32> -> vector<2x128xf32>
    %193 = arith.addf %192, %5 : vector<2x128xf32>
    %194 = vector.extract_strided_slice %193 {offsets = [0, 0], sizes = [2, 32], strides = [1, 1]} : vector<2x128xf32> to vector<2x32xf32>
    %195 = arith.negf %194 : vector<2x32xf32>
    %196 = math.exp %195 : vector<2x32xf32>
    %cst_49 = arith.constant 1.000000e+00 : f32
    %197 = vector.broadcast %cst_49 : f32 to vector<2x32xf32>
    %198 = arith.addf %197, %196 : vector<2x32xf32>
    %199 = arith.divf %197, %198 : vector<2x32xf32>
    %200 = vector.extract_strided_slice %193 {offsets = [0, 32], sizes = [2, 32], strides = [1, 1]} : vector<2x128xf32> to vector<2x32xf32>
    %201 = arith.negf %200 : vector<2x32xf32>
    %202 = math.exp %201 : vector<2x32xf32>
    %cst_50 = arith.constant 1.000000e+00 : f32
    %203 = vector.broadcast %cst_50 : f32 to vector<2x32xf32>
    %204 = arith.addf %203, %202 : vector<2x32xf32>
    %205 = arith.divf %203, %204 : vector<2x32xf32>
    %206 = vector.extract_strided_slice %193 {offsets = [0, 64], sizes = [2, 32], strides = [1, 1]} : vector<2x128xf32> to vector<2x32xf32>
    %207 = math.tanh %206 : vector<2x32xf32>
    %208 = vector.extract_strided_slice %193 {offsets = [0, 96], sizes = [2, 32], strides = [1, 1]} : vector<2x128xf32> to vector<2x32xf32>
    %209 = arith.negf %208 : vector<2x32xf32>
    %210 = math.exp %209 : vector<2x32xf32>
    %cst_51 = arith.constant 1.000000e+00 : f32
    %211 = vector.broadcast %cst_51 : f32 to vector<2x32xf32>
    %212 = arith.addf %211, %210 : vector<2x32xf32>
    %213 = arith.divf %211, %212 : vector<2x32xf32>
    %214 = arith.mulf %205, %181 : vector<2x32xf32>
    %215 = arith.mulf %199, %207 : vector<2x32xf32>
    %216 = arith.addf %214, %215 : vector<2x32xf32>
    %217 = math.tanh %216 : vector<2x32xf32>
    %218 = arith.mulf %213, %217 : vector<2x32xf32>
    %219 = arith.mulf %218, %12 : vector<2x32xf32>
    %cst_52 = arith.constant dense<0.000000e+00> : vector<2xf32>
    %220 = vector.multi_reduction <add>, %219, %cst_52 [1] : vector<2x32xf32> to vector<2xf32>
    %221 = vector.shape_cast %220 : vector<2xf32> to vector<2x1xf32>
    %222 = arith.addf %221, %8 : vector<2x1xf32>
    %c0_53 = arith.constant 0 : index
    %c6 = arith.constant 6 : index
    %c0_54 = arith.constant 0 : index
    %223 = vector.load %arg1[%c0_53, %c6, %c0_54] : memref<2x16x8xf32, #tpu.memory_space<vmem>>, vector<2x1x8xf32>
    %224 = vector.shape_cast %223 : vector<2x1x8xf32> to vector<2x8xf32>
    %225 = tpu.concatenate %224, %218 in 1 : vector<2x8xf32>, vector<2x32xf32> -> vector<2x40xf32>
    %226 = arith.truncf %225 : vector<2x40xf32> to vector<2x40xbf16>
    %cst_55 = arith.constant dense<0.000000e+00> : vector<2x128xf32>
    %227 = tpu.matmul %226, %0, %cst_55 {dimension_numbers = #tpu.dot_dimension_numbers<[1], [0], [0], [1], [0, 0, 1, 1], [], []>} : vector<2x40xbf16>, vector<40x128xbf16>, vector<2x128xf32> -> vector<2x128xf32>
    %228 = arith.addf %227, %5 : vector<2x128xf32>
    %229 = vector.extract_strided_slice %228 {offsets = [0, 0], sizes = [2, 32], strides = [1, 1]} : vector<2x128xf32> to vector<2x32xf32>
    %230 = arith.negf %229 : vector<2x32xf32>
    %231 = math.exp %230 : vector<2x32xf32>
    %cst_56 = arith.constant 1.000000e+00 : f32
    %232 = vector.broadcast %cst_56 : f32 to vector<2x32xf32>
    %233 = arith.addf %232, %231 : vector<2x32xf32>
    %234 = arith.divf %232, %233 : vector<2x32xf32>
    %235 = vector.extract_strided_slice %228 {offsets = [0, 32], sizes = [2, 32], strides = [1, 1]} : vector<2x128xf32> to vector<2x32xf32>
    %236 = arith.negf %235 : vector<2x32xf32>
    %237 = math.exp %236 : vector<2x32xf32>
    %cst_57 = arith.constant 1.000000e+00 : f32
    %238 = vector.broadcast %cst_57 : f32 to vector<2x32xf32>
    %239 = arith.addf %238, %237 : vector<2x32xf32>
    %240 = arith.divf %238, %239 : vector<2x32xf32>
    %241 = vector.extract_strided_slice %228 {offsets = [0, 64], sizes = [2, 32], strides = [1, 1]} : vector<2x128xf32> to vector<2x32xf32>
    %242 = math.tanh %241 : vector<2x32xf32>
    %243 = vector.extract_strided_slice %228 {offsets = [0, 96], sizes = [2, 32], strides = [1, 1]} : vector<2x128xf32> to vector<2x32xf32>
    %244 = arith.negf %243 : vector<2x32xf32>
    %245 = math.exp %244 : vector<2x32xf32>
    %cst_58 = arith.constant 1.000000e+00 : f32
    %246 = vector.broadcast %cst_58 : f32 to vector<2x32xf32>
    %247 = arith.addf %246, %245 : vector<2x32xf32>
    %248 = arith.divf %246, %247 : vector<2x32xf32>
    %249 = arith.mulf %240, %216 : vector<2x32xf32>
    %250 = arith.mulf %234, %242 : vector<2x32xf32>
    %251 = arith.addf %249, %250 : vector<2x32xf32>
    %252 = math.tanh %251 : vector<2x32xf32>
    %253 = arith.mulf %248, %252 : vector<2x32xf32>
    %254 = arith.mulf %253, %12 : vector<2x32xf32>
    %cst_59 = arith.constant dense<0.000000e+00> : vector<2xf32>
    %255 = vector.multi_reduction <add>, %254, %cst_59 [1] : vector<2x32xf32> to vector<2xf32>
    %256 = vector.shape_cast %255 : vector<2xf32> to vector<2x1xf32>
    %257 = arith.addf %256, %8 : vector<2x1xf32>
    %c0_60 = arith.constant 0 : index
    %c7 = arith.constant 7 : index
    %c0_61 = arith.constant 0 : index
    %258 = vector.load %arg1[%c0_60, %c7, %c0_61] : memref<2x16x8xf32, #tpu.memory_space<vmem>>, vector<2x1x8xf32>
    %259 = vector.shape_cast %258 : vector<2x1x8xf32> to vector<2x8xf32>
    %260 = tpu.concatenate %259, %253 in 1 : vector<2x8xf32>, vector<2x32xf32> -> vector<2x40xf32>
    %261 = arith.truncf %260 : vector<2x40xf32> to vector<2x40xbf16>
    %cst_62 = arith.constant dense<0.000000e+00> : vector<2x128xf32>
    %262 = tpu.matmul %261, %0, %cst_62 {dimension_numbers = #tpu.dot_dimension_numbers<[1], [0], [0], [1], [0, 0, 1, 1], [], []>} : vector<2x40xbf16>, vector<40x128xbf16>, vector<2x128xf32> -> vector<2x128xf32>
    %263 = arith.addf %262, %5 : vector<2x128xf32>
    %264 = vector.extract_strided_slice %263 {offsets = [0, 0], sizes = [2, 32], strides = [1, 1]} : vector<2x128xf32> to vector<2x32xf32>
    %265 = arith.negf %264 : vector<2x32xf32>
    %266 = math.exp %265 : vector<2x32xf32>
    %cst_63 = arith.constant 1.000000e+00 : f32
    %267 = vector.broadcast %cst_63 : f32 to vector<2x32xf32>
    %268 = arith.addf %267, %266 : vector<2x32xf32>
    %269 = arith.divf %267, %268 : vector<2x32xf32>
    %270 = vector.extract_strided_slice %263 {offsets = [0, 32], sizes = [2, 32], strides = [1, 1]} : vector<2x128xf32> to vector<2x32xf32>
    %271 = arith.negf %270 : vector<2x32xf32>
    %272 = math.exp %271 : vector<2x32xf32>
    %cst_64 = arith.constant 1.000000e+00 : f32
    %273 = vector.broadcast %cst_64 : f32 to vector<2x32xf32>
    %274 = arith.addf %273, %272 : vector<2x32xf32>
    %275 = arith.divf %273, %274 : vector<2x32xf32>
    %276 = vector.extract_strided_slice %263 {offsets = [0, 64], sizes = [2, 32], strides = [1, 1]} : vector<2x128xf32> to vector<2x32xf32>
    %277 = math.tanh %276 : vector<2x32xf32>
    %278 = vector.extract_strided_slice %263 {offsets = [0, 96], sizes = [2, 32], strides = [1, 1]} : vector<2x128xf32> to vector<2x32xf32>
    %279 = arith.negf %278 : vector<2x32xf32>
    %280 = math.exp %279 : vector<2x32xf32>
    %cst_65 = arith.constant 1.000000e+00 : f32
    %281 = vector.broadcast %cst_65 : f32 to vector<2x32xf32>
    %282 = arith.addf %281, %280 : vector<2x32xf32>
    %283 = arith.divf %281, %282 : vector<2x32xf32>
    %284 = arith.mulf %275, %251 : vector<2x32xf32>
    %285 = arith.mulf %269, %277 : vector<2x32xf32>
    %286 = arith.addf %284, %285 : vector<2x32xf32>
    %287 = math.tanh %286 : vector<2x32xf32>
    %288 = arith.mulf %283, %287 : vector<2x32xf32>
    %289 = arith.mulf %288, %12 : vector<2x32xf32>
    %cst_66 = arith.constant dense<0.000000e+00> : vector<2xf32>
    %290 = vector.multi_reduction <add>, %289, %cst_66 [1] : vector<2x32xf32> to vector<2xf32>
    %291 = vector.shape_cast %290 : vector<2xf32> to vector<2x1xf32>
    %292 = arith.addf %291, %8 : vector<2x1xf32>
    %c0_67 = arith.constant 0 : index
    %c8 = arith.constant 8 : index
    %c0_68 = arith.constant 0 : index
    %293 = vector.load %arg1[%c0_67, %c8, %c0_68] : memref<2x16x8xf32, #tpu.memory_space<vmem>>, vector<2x1x8xf32>
    %294 = vector.shape_cast %293 : vector<2x1x8xf32> to vector<2x8xf32>
    %295 = tpu.concatenate %294, %288 in 1 : vector<2x8xf32>, vector<2x32xf32> -> vector<2x40xf32>
    %296 = arith.truncf %295 : vector<2x40xf32> to vector<2x40xbf16>
    %cst_69 = arith.constant dense<0.000000e+00> : vector<2x128xf32>
    %297 = tpu.matmul %296, %0, %cst_69 {dimension_numbers = #tpu.dot_dimension_numbers<[1], [0], [0], [1], [0, 0, 1, 1], [], []>} : vector<2x40xbf16>, vector<40x128xbf16>, vector<2x128xf32> -> vector<2x128xf32>
    %298 = arith.addf %297, %5 : vector<2x128xf32>
    %299 = vector.extract_strided_slice %298 {offsets = [0, 0], sizes = [2, 32], strides = [1, 1]} : vector<2x128xf32> to vector<2x32xf32>
    %300 = arith.negf %299 : vector<2x32xf32>
    %301 = math.exp %300 : vector<2x32xf32>
    %cst_70 = arith.constant 1.000000e+00 : f32
    %302 = vector.broadcast %cst_70 : f32 to vector<2x32xf32>
    %303 = arith.addf %302, %301 : vector<2x32xf32>
    %304 = arith.divf %302, %303 : vector<2x32xf32>
    %305 = vector.extract_strided_slice %298 {offsets = [0, 32], sizes = [2, 32], strides = [1, 1]} : vector<2x128xf32> to vector<2x32xf32>
    %306 = arith.negf %305 : vector<2x32xf32>
    %307 = math.exp %306 : vector<2x32xf32>
    %cst_71 = arith.constant 1.000000e+00 : f32
    %308 = vector.broadcast %cst_71 : f32 to vector<2x32xf32>
    %309 = arith.addf %308, %307 : vector<2x32xf32>
    %310 = arith.divf %308, %309 : vector<2x32xf32>
    %311 = vector.extract_strided_slice %298 {offsets = [0, 64], sizes = [2, 32], strides = [1, 1]} : vector<2x128xf32> to vector<2x32xf32>
    %312 = math.tanh %311 : vector<2x32xf32>
    %313 = vector.extract_strided_slice %298 {offsets = [0, 96], sizes = [2, 32], strides = [1, 1]} : vector<2x128xf32> to vector<2x32xf32>
    %314 = arith.negf %313 : vector<2x32xf32>
    %315 = math.exp %314 : vector<2x32xf32>
    %cst_72 = arith.constant 1.000000e+00 : f32
    %316 = vector.broadcast %cst_72 : f32 to vector<2x32xf32>
    %317 = arith.addf %316, %315 : vector<2x32xf32>
    %318 = arith.divf %316, %317 : vector<2x32xf32>
    %319 = arith.mulf %310, %286 : vector<2x32xf32>
    %320 = arith.mulf %304, %312 : vector<2x32xf32>
    %321 = arith.addf %319, %320 : vector<2x32xf32>
    %322 = math.tanh %321 : vector<2x32xf32>
    %323 = arith.mulf %318, %322 : vector<2x32xf32>
    %324 = arith.mulf %323, %12 : vector<2x32xf32>
    %cst_73 = arith.constant dense<0.000000e+00> : vector<2xf32>
    %325 = vector.multi_reduction <add>, %324, %cst_73 [1] : vector<2x32xf32> to vector<2xf32>
    %326 = vector.shape_cast %325 : vector<2xf32> to vector<2x1xf32>
    %327 = arith.addf %326, %8 : vector<2x1xf32>
    %c0_74 = arith.constant 0 : index
    %c9 = arith.constant 9 : index
    %c0_75 = arith.constant 0 : index
    %328 = vector.load %arg1[%c0_74, %c9, %c0_75] : memref<2x16x8xf32, #tpu.memory_space<vmem>>, vector<2x1x8xf32>
    %329 = vector.shape_cast %328 : vector<2x1x8xf32> to vector<2x8xf32>
    %330 = tpu.concatenate %329, %323 in 1 : vector<2x8xf32>, vector<2x32xf32> -> vector<2x40xf32>
    %331 = arith.truncf %330 : vector<2x40xf32> to vector<2x40xbf16>
    %cst_76 = arith.constant dense<0.000000e+00> : vector<2x128xf32>
    %332 = tpu.matmul %331, %0, %cst_76 {dimension_numbers = #tpu.dot_dimension_numbers<[1], [0], [0], [1], [0, 0, 1, 1], [], []>} : vector<2x40xbf16>, vector<40x128xbf16>, vector<2x128xf32> -> vector<2x128xf32>
    %333 = arith.addf %332, %5 : vector<2x128xf32>
    %334 = vector.extract_strided_slice %333 {offsets = [0, 0], sizes = [2, 32], strides = [1, 1]} : vector<2x128xf32> to vector<2x32xf32>
    %335 = arith.negf %334 : vector<2x32xf32>
    %336 = math.exp %335 : vector<2x32xf32>
    %cst_77 = arith.constant 1.000000e+00 : f32
    %337 = vector.broadcast %cst_77 : f32 to vector<2x32xf32>
    %338 = arith.addf %337, %336 : vector<2x32xf32>
    %339 = arith.divf %337, %338 : vector<2x32xf32>
    %340 = vector.extract_strided_slice %333 {offsets = [0, 32], sizes = [2, 32], strides = [1, 1]} : vector<2x128xf32> to vector<2x32xf32>
    %341 = arith.negf %340 : vector<2x32xf32>
    %342 = math.exp %341 : vector<2x32xf32>
    %cst_78 = arith.constant 1.000000e+00 : f32
    %343 = vector.broadcast %cst_78 : f32 to vector<2x32xf32>
    %344 = arith.addf %343, %342 : vector<2x32xf32>
    %345 = arith.divf %343, %344 : vector<2x32xf32>
    %346 = vector.extract_strided_slice %333 {offsets = [0, 64], sizes = [2, 32], strides = [1, 1]} : vector<2x128xf32> to vector<2x32xf32>
    %347 = math.tanh %346 : vector<2x32xf32>
    %348 = vector.extract_strided_slice %333 {offsets = [0, 96], sizes = [2, 32], strides = [1, 1]} : vector<2x128xf32> to vector<2x32xf32>
    %349 = arith.negf %348 : vector<2x32xf32>
    %350 = math.exp %349 : vector<2x32xf32>
    %cst_79 = arith.constant 1.000000e+00 : f32
    %351 = vector.broadcast %cst_79 : f32 to vector<2x32xf32>
    %352 = arith.addf %351, %350 : vector<2x32xf32>
    %353 = arith.divf %351, %352 : vector<2x32xf32>
    %354 = arith.mulf %345, %321 : vector<2x32xf32>
    %355 = arith.mulf %339, %347 : vector<2x32xf32>
    %356 = arith.addf %354, %355 : vector<2x32xf32>
    %357 = math.tanh %356 : vector<2x32xf32>
    %358 = arith.mulf %353, %357 : vector<2x32xf32>
    %359 = arith.mulf %358, %12 : vector<2x32xf32>
    %cst_80 = arith.constant dense<0.000000e+00> : vector<2xf32>
    %360 = vector.multi_reduction <add>, %359, %cst_80 [1] : vector<2x32xf32> to vector<2xf32>
    %361 = vector.shape_cast %360 : vector<2xf32> to vector<2x1xf32>
    %362 = arith.addf %361, %8 : vector<2x1xf32>
    %c0_81 = arith.constant 0 : index
    %c10 = arith.constant 10 : index
    %c0_82 = arith.constant 0 : index
    %363 = vector.load %arg1[%c0_81, %c10, %c0_82] : memref<2x16x8xf32, #tpu.memory_space<vmem>>, vector<2x1x8xf32>
    %364 = vector.shape_cast %363 : vector<2x1x8xf32> to vector<2x8xf32>
    %365 = tpu.concatenate %364, %358 in 1 : vector<2x8xf32>, vector<2x32xf32> -> vector<2x40xf32>
    %366 = arith.truncf %365 : vector<2x40xf32> to vector<2x40xbf16>
    %cst_83 = arith.constant dense<0.000000e+00> : vector<2x128xf32>
    %367 = tpu.matmul %366, %0, %cst_83 {dimension_numbers = #tpu.dot_dimension_numbers<[1], [0], [0], [1], [0, 0, 1, 1], [], []>} : vector<2x40xbf16>, vector<40x128xbf16>, vector<2x128xf32> -> vector<2x128xf32>
    %368 = arith.addf %367, %5 : vector<2x128xf32>
    %369 = vector.extract_strided_slice %368 {offsets = [0, 0], sizes = [2, 32], strides = [1, 1]} : vector<2x128xf32> to vector<2x32xf32>
    %370 = arith.negf %369 : vector<2x32xf32>
    %371 = math.exp %370 : vector<2x32xf32>
    %cst_84 = arith.constant 1.000000e+00 : f32
    %372 = vector.broadcast %cst_84 : f32 to vector<2x32xf32>
    %373 = arith.addf %372, %371 : vector<2x32xf32>
    %374 = arith.divf %372, %373 : vector<2x32xf32>
    %375 = vector.extract_strided_slice %368 {offsets = [0, 32], sizes = [2, 32], strides = [1, 1]} : vector<2x128xf32> to vector<2x32xf32>
    %376 = arith.negf %375 : vector<2x32xf32>
    %377 = math.exp %376 : vector<2x32xf32>
    %cst_85 = arith.constant 1.000000e+00 : f32
    %378 = vector.broadcast %cst_85 : f32 to vector<2x32xf32>
    %379 = arith.addf %378, %377 : vector<2x32xf32>
    %380 = arith.divf %378, %379 : vector<2x32xf32>
    %381 = vector.extract_strided_slice %368 {offsets = [0, 64], sizes = [2, 32], strides = [1, 1]} : vector<2x128xf32> to vector<2x32xf32>
    %382 = math.tanh %381 : vector<2x32xf32>
    %383 = vector.extract_strided_slice %368 {offsets = [0, 96], sizes = [2, 32], strides = [1, 1]} : vector<2x128xf32> to vector<2x32xf32>
    %384 = arith.negf %383 : vector<2x32xf32>
    %385 = math.exp %384 : vector<2x32xf32>
    %cst_86 = arith.constant 1.000000e+00 : f32
    %386 = vector.broadcast %cst_86 : f32 to vector<2x32xf32>
    %387 = arith.addf %386, %385 : vector<2x32xf32>
    %388 = arith.divf %386, %387 : vector<2x32xf32>
    %389 = arith.mulf %380, %356 : vector<2x32xf32>
    %390 = arith.mulf %374, %382 : vector<2x32xf32>
    %391 = arith.addf %389, %390 : vector<2x32xf32>
    %392 = math.tanh %391 : vector<2x32xf32>
    %393 = arith.mulf %388, %392 : vector<2x32xf32>
    %394 = arith.mulf %393, %12 : vector<2x32xf32>
    %cst_87 = arith.constant dense<0.000000e+00> : vector<2xf32>
    %395 = vector.multi_reduction <add>, %394, %cst_87 [1] : vector<2x32xf32> to vector<2xf32>
    %396 = vector.shape_cast %395 : vector<2xf32> to vector<2x1xf32>
    %397 = arith.addf %396, %8 : vector<2x1xf32>
    %c0_88 = arith.constant 0 : index
    %c11 = arith.constant 11 : index
    %c0_89 = arith.constant 0 : index
    %398 = vector.load %arg1[%c0_88, %c11, %c0_89] : memref<2x16x8xf32, #tpu.memory_space<vmem>>, vector<2x1x8xf32>
    %399 = vector.shape_cast %398 : vector<2x1x8xf32> to vector<2x8xf32>
    %400 = tpu.concatenate %399, %393 in 1 : vector<2x8xf32>, vector<2x32xf32> -> vector<2x40xf32>
    %401 = arith.truncf %400 : vector<2x40xf32> to vector<2x40xbf16>
    %cst_90 = arith.constant dense<0.000000e+00> : vector<2x128xf32>
    %402 = tpu.matmul %401, %0, %cst_90 {dimension_numbers = #tpu.dot_dimension_numbers<[1], [0], [0], [1], [0, 0, 1, 1], [], []>} : vector<2x40xbf16>, vector<40x128xbf16>, vector<2x128xf32> -> vector<2x128xf32>
    %403 = arith.addf %402, %5 : vector<2x128xf32>
    %404 = vector.extract_strided_slice %403 {offsets = [0, 0], sizes = [2, 32], strides = [1, 1]} : vector<2x128xf32> to vector<2x32xf32>
    %405 = arith.negf %404 : vector<2x32xf32>
    %406 = math.exp %405 : vector<2x32xf32>
    %cst_91 = arith.constant 1.000000e+00 : f32
    %407 = vector.broadcast %cst_91 : f32 to vector<2x32xf32>
    %408 = arith.addf %407, %406 : vector<2x32xf32>
    %409 = arith.divf %407, %408 : vector<2x32xf32>
    %410 = vector.extract_strided_slice %403 {offsets = [0, 32], sizes = [2, 32], strides = [1, 1]} : vector<2x128xf32> to vector<2x32xf32>
    %411 = arith.negf %410 : vector<2x32xf32>
    %412 = math.exp %411 : vector<2x32xf32>
    %cst_92 = arith.constant 1.000000e+00 : f32
    %413 = vector.broadcast %cst_92 : f32 to vector<2x32xf32>
    %414 = arith.addf %413, %412 : vector<2x32xf32>
    %415 = arith.divf %413, %414 : vector<2x32xf32>
    %416 = vector.extract_strided_slice %403 {offsets = [0, 64], sizes = [2, 32], strides = [1, 1]} : vector<2x128xf32> to vector<2x32xf32>
    %417 = math.tanh %416 : vector<2x32xf32>
    %418 = vector.extract_strided_slice %403 {offsets = [0, 96], sizes = [2, 32], strides = [1, 1]} : vector<2x128xf32> to vector<2x32xf32>
    %419 = arith.negf %418 : vector<2x32xf32>
    %420 = math.exp %419 : vector<2x32xf32>
    %cst_93 = arith.constant 1.000000e+00 : f32
    %421 = vector.broadcast %cst_93 : f32 to vector<2x32xf32>
    %422 = arith.addf %421, %420 : vector<2x32xf32>
    %423 = arith.divf %421, %422 : vector<2x32xf32>
    %424 = arith.mulf %415, %391 : vector<2x32xf32>
    %425 = arith.mulf %409, %417 : vector<2x32xf32>
    %426 = arith.addf %424, %425 : vector<2x32xf32>
    %427 = math.tanh %426 : vector<2x32xf32>
    %428 = arith.mulf %423, %427 : vector<2x32xf32>
    %429 = arith.mulf %428, %12 : vector<2x32xf32>
    %cst_94 = arith.constant dense<0.000000e+00> : vector<2xf32>
    %430 = vector.multi_reduction <add>, %429, %cst_94 [1] : vector<2x32xf32> to vector<2xf32>
    %431 = vector.shape_cast %430 : vector<2xf32> to vector<2x1xf32>
    %432 = arith.addf %431, %8 : vector<2x1xf32>
    %433 = tpu.iota {dimensions = array<i32: 1>} : vector<2x8xi32>
    %c0_i32 = arith.constant 0 : i32
    %434 = vector.broadcast %c0_i32 : i32 to vector<2x8xi32>
    %435 = arith.cmpi eq, %433, %434 : vector<2x8xi32>
    %c4_i32 = arith.constant 4 : i32
    %436 = vector.broadcast %c4_i32 : i32 to vector<2x8xi32>
    %437 = arith.cmpi eq, %433, %436 : vector<2x8xi32>
    %c5_i32 = arith.constant 5 : i32
    %438 = vector.broadcast %c5_i32 : i32 to vector<2x8xi32>
    %439 = arith.cmpi eq, %433, %438 : vector<2x8xi32>
    %c6_i32 = arith.constant 6 : i32
    %440 = vector.broadcast %c6_i32 : i32 to vector<2x8xi32>
    %441 = arith.cmpi eq, %433, %440 : vector<2x8xi32>
    %c7_i32 = arith.constant 7 : i32
    %442 = vector.broadcast %c7_i32 : i32 to vector<2x8xi32>
    %443 = arith.cmpi eq, %433, %442 : vector<2x8xi32>
    %c0_95 = arith.constant 0 : index
    %c0_96 = arith.constant 0 : index
    %444 = vector.load %arg2[%c0_95, %c0_96] : memref<2x7xf32, #tpu.memory_space<vmem>>, vector<2x1xf32>
    %c0_97 = arith.constant 0 : index
    %c1_98 = arith.constant 1 : index
    %445 = vector.load %arg2[%c0_97, %c1_98] : memref<2x7xf32, #tpu.memory_space<vmem>>, vector<2x1xf32>
    %c0_99 = arith.constant 0 : index
    %c2_100 = arith.constant 2 : index
    %446 = vector.load %arg2[%c0_99, %c2_100] : memref<2x7xf32, #tpu.memory_space<vmem>>, vector<2x1xf32>
    %c0_101 = arith.constant 0 : index
    %c3_102 = arith.constant 3 : index
    %447 = vector.load %arg2[%c0_101, %c3_102] : memref<2x7xf32, #tpu.memory_space<vmem>>, vector<2x1xf32>
    %c0_103 = arith.constant 0 : index
    %c4_104 = arith.constant 4 : index
    %448 = vector.load %arg2[%c0_103, %c4_104] : memref<2x7xf32, #tpu.memory_space<vmem>>, vector<2x1xf32>
    %c0_105 = arith.constant 0 : index
    %c5_106 = arith.constant 5 : index
    %449 = vector.load %arg2[%c0_105, %c5_106] : memref<2x7xf32, #tpu.memory_space<vmem>>, vector<2x1xf32>
    %c0_107 = arith.constant 0 : index
    %c6_108 = arith.constant 6 : index
    %450 = vector.load %arg2[%c0_107, %c6_108] : memref<2x7xf32, #tpu.memory_space<vmem>>, vector<2x1xf32>
    %c0_109 = arith.constant 0 : index
    %c12 = arith.constant 12 : index
    %c0_110 = arith.constant 0 : index
    %451 = vector.load %arg1[%c0_109, %c12, %c0_110] : memref<2x16x8xf32, #tpu.memory_space<vmem>>, vector<2x1x8xf32>
    %452 = vector.shape_cast %451 : vector<2x1x8xf32> to vector<2x8xf32>
    %453 = vector.shape_cast %432 : vector<2x1xf32> to vector<2x1xf32>
    %454 = vector.broadcast %453 : vector<2x1xf32> to vector<2x8xf32>
    %455 = arith.select %435, %454, %452 : vector<2x8xi1>, vector<2x8xf32>
    %456 = vector.shape_cast %444 : vector<2x1xf32> to vector<2x1xf32>
    %457 = vector.broadcast %456 : vector<2x1xf32> to vector<2x8xf32>
    %458 = arith.select %437, %457, %455 : vector<2x8xi1>, vector<2x8xf32>
    %459 = vector.shape_cast %445 : vector<2x1xf32> to vector<2x1xf32>
    %460 = vector.broadcast %459 : vector<2x1xf32> to vector<2x8xf32>
    %461 = arith.select %439, %460, %458 : vector<2x8xi1>, vector<2x8xf32>
    %462 = vector.shape_cast %447 : vector<2x1xf32> to vector<2x1xf32>
    %463 = vector.broadcast %462 : vector<2x1xf32> to vector<2x8xf32>
    %464 = arith.select %441, %463, %461 : vector<2x8xi1>, vector<2x8xf32>
    %465 = vector.shape_cast %450 : vector<2x1xf32> to vector<2x1xf32>
    %466 = vector.broadcast %465 : vector<2x1xf32> to vector<2x8xf32>
    %467 = arith.select %443, %466, %464 : vector<2x8xi1>, vector<2x8xf32>
    %468 = tpu.concatenate %467, %428 in 1 : vector<2x8xf32>, vector<2x32xf32> -> vector<2x40xf32>
    %469 = arith.truncf %468 : vector<2x40xf32> to vector<2x40xbf16>
    %cst_111 = arith.constant dense<0.000000e+00> : vector<2x128xf32>
    %470 = tpu.matmul %469, %0, %cst_111 {dimension_numbers = #tpu.dot_dimension_numbers<[1], [0], [0], [1], [0, 0, 1, 1], [], []>} : vector<2x40xbf16>, vector<40x128xbf16>, vector<2x128xf32> -> vector<2x128xf32>
    %471 = arith.addf %470, %5 : vector<2x128xf32>
    %472 = vector.extract_strided_slice %471 {offsets = [0, 0], sizes = [2, 32], strides = [1, 1]} : vector<2x128xf32> to vector<2x32xf32>
    %473 = arith.negf %472 : vector<2x32xf32>
    %474 = math.exp %473 : vector<2x32xf32>
    %cst_112 = arith.constant 1.000000e+00 : f32
    %475 = vector.broadcast %cst_112 : f32 to vector<2x32xf32>
    %476 = arith.addf %475, %474 : vector<2x32xf32>
    %477 = arith.divf %475, %476 : vector<2x32xf32>
    %478 = vector.extract_strided_slice %471 {offsets = [0, 32], sizes = [2, 32], strides = [1, 1]} : vector<2x128xf32> to vector<2x32xf32>
    %479 = arith.negf %478 : vector<2x32xf32>
    %480 = math.exp %479 : vector<2x32xf32>
    %cst_113 = arith.constant 1.000000e+00 : f32
    %481 = vector.broadcast %cst_113 : f32 to vector<2x32xf32>
    %482 = arith.addf %481, %480 : vector<2x32xf32>
    %483 = arith.divf %481, %482 : vector<2x32xf32>
    %484 = vector.extract_strided_slice %471 {offsets = [0, 64], sizes = [2, 32], strides = [1, 1]} : vector<2x128xf32> to vector<2x32xf32>
    %485 = math.tanh %484 : vector<2x32xf32>
    %486 = vector.extract_strided_slice %471 {offsets = [0, 96], sizes = [2, 32], strides = [1, 1]} : vector<2x128xf32> to vector<2x32xf32>
    %487 = arith.negf %486 : vector<2x32xf32>
    %488 = math.exp %487 : vector<2x32xf32>
    %cst_114 = arith.constant 1.000000e+00 : f32
    %489 = vector.broadcast %cst_114 : f32 to vector<2x32xf32>
    %490 = arith.addf %489, %488 : vector<2x32xf32>
    %491 = arith.divf %489, %490 : vector<2x32xf32>
    %492 = arith.mulf %483, %426 : vector<2x32xf32>
    %493 = arith.mulf %477, %485 : vector<2x32xf32>
    %494 = arith.addf %492, %493 : vector<2x32xf32>
    %495 = math.tanh %494 : vector<2x32xf32>
    %496 = arith.mulf %491, %495 : vector<2x32xf32>
    %497 = arith.mulf %496, %12 : vector<2x32xf32>
    %cst_115 = arith.constant dense<0.000000e+00> : vector<2xf32>
    %498 = vector.multi_reduction <add>, %497, %cst_115 [1] : vector<2x32xf32> to vector<2xf32>
    %499 = vector.shape_cast %498 : vector<2xf32> to vector<2x1xf32>
    %500 = arith.addf %499, %8 : vector<2x1xf32>
    %c0_116 = arith.constant 0 : index
    %c13 = arith.constant 13 : index
    %c0_117 = arith.constant 0 : index
    %501 = vector.load %arg1[%c0_116, %c13, %c0_117] : memref<2x16x8xf32, #tpu.memory_space<vmem>>, vector<2x1x8xf32>
    %502 = vector.shape_cast %501 : vector<2x1x8xf32> to vector<2x8xf32>
    %503 = vector.shape_cast %500 : vector<2x1xf32> to vector<2x1xf32>
    %504 = vector.broadcast %503 : vector<2x1xf32> to vector<2x8xf32>
    %505 = arith.select %435, %504, %502 : vector<2x8xi1>, vector<2x8xf32>
    %506 = vector.shape_cast %432 : vector<2x1xf32> to vector<2x1xf32>
    %507 = vector.broadcast %506 : vector<2x1xf32> to vector<2x8xf32>
    %508 = arith.select %437, %507, %505 : vector<2x8xi1>, vector<2x8xf32>
    %509 = vector.shape_cast %444 : vector<2x1xf32> to vector<2x1xf32>
    %510 = vector.broadcast %509 : vector<2x1xf32> to vector<2x8xf32>
    %511 = arith.select %439, %510, %508 : vector<2x8xi1>, vector<2x8xf32>
    %512 = vector.shape_cast %446 : vector<2x1xf32> to vector<2x1xf32>
    %513 = vector.broadcast %512 : vector<2x1xf32> to vector<2x8xf32>
    %514 = arith.select %441, %513, %511 : vector<2x8xi1>, vector<2x8xf32>
    %515 = vector.shape_cast %449 : vector<2x1xf32> to vector<2x1xf32>
    %516 = vector.broadcast %515 : vector<2x1xf32> to vector<2x8xf32>
    %517 = arith.select %443, %516, %514 : vector<2x8xi1>, vector<2x8xf32>
    %518 = tpu.concatenate %517, %496 in 1 : vector<2x8xf32>, vector<2x32xf32> -> vector<2x40xf32>
    %519 = arith.truncf %518 : vector<2x40xf32> to vector<2x40xbf16>
    %cst_118 = arith.constant dense<0.000000e+00> : vector<2x128xf32>
    %520 = tpu.matmul %519, %0, %cst_118 {dimension_numbers = #tpu.dot_dimension_numbers<[1], [0], [0], [1], [0, 0, 1, 1], [], []>} : vector<2x40xbf16>, vector<40x128xbf16>, vector<2x128xf32> -> vector<2x128xf32>
    %521 = arith.addf %520, %5 : vector<2x128xf32>
    %522 = vector.extract_strided_slice %521 {offsets = [0, 0], sizes = [2, 32], strides = [1, 1]} : vector<2x128xf32> to vector<2x32xf32>
    %523 = arith.negf %522 : vector<2x32xf32>
    %524 = math.exp %523 : vector<2x32xf32>
    %cst_119 = arith.constant 1.000000e+00 : f32
    %525 = vector.broadcast %cst_119 : f32 to vector<2x32xf32>
    %526 = arith.addf %525, %524 : vector<2x32xf32>
    %527 = arith.divf %525, %526 : vector<2x32xf32>
    %528 = vector.extract_strided_slice %521 {offsets = [0, 32], sizes = [2, 32], strides = [1, 1]} : vector<2x128xf32> to vector<2x32xf32>
    %529 = arith.negf %528 : vector<2x32xf32>
    %530 = math.exp %529 : vector<2x32xf32>
    %cst_120 = arith.constant 1.000000e+00 : f32
    %531 = vector.broadcast %cst_120 : f32 to vector<2x32xf32>
    %532 = arith.addf %531, %530 : vector<2x32xf32>
    %533 = arith.divf %531, %532 : vector<2x32xf32>
    %534 = vector.extract_strided_slice %521 {offsets = [0, 64], sizes = [2, 32], strides = [1, 1]} : vector<2x128xf32> to vector<2x32xf32>
    %535 = math.tanh %534 : vector<2x32xf32>
    %536 = vector.extract_strided_slice %521 {offsets = [0, 96], sizes = [2, 32], strides = [1, 1]} : vector<2x128xf32> to vector<2x32xf32>
    %537 = arith.negf %536 : vector<2x32xf32>
    %538 = math.exp %537 : vector<2x32xf32>
    %cst_121 = arith.constant 1.000000e+00 : f32
    %539 = vector.broadcast %cst_121 : f32 to vector<2x32xf32>
    %540 = arith.addf %539, %538 : vector<2x32xf32>
    %541 = arith.divf %539, %540 : vector<2x32xf32>
    %542 = arith.mulf %533, %494 : vector<2x32xf32>
    %543 = arith.mulf %527, %535 : vector<2x32xf32>
    %544 = arith.addf %542, %543 : vector<2x32xf32>
    %545 = math.tanh %544 : vector<2x32xf32>
    %546 = arith.mulf %541, %545 : vector<2x32xf32>
    %547 = arith.mulf %546, %12 : vector<2x32xf32>
    %cst_122 = arith.constant dense<0.000000e+00> : vector<2xf32>
    %548 = vector.multi_reduction <add>, %547, %cst_122 [1] : vector<2x32xf32> to vector<2xf32>
    %549 = vector.shape_cast %548 : vector<2xf32> to vector<2x1xf32>
    %550 = arith.addf %549, %8 : vector<2x1xf32>
    %c0_123 = arith.constant 0 : index
    %c14 = arith.constant 14 : index
    %c0_124 = arith.constant 0 : index
    %551 = vector.load %arg1[%c0_123, %c14, %c0_124] : memref<2x16x8xf32, #tpu.memory_space<vmem>>, vector<2x1x8xf32>
    %552 = vector.shape_cast %551 : vector<2x1x8xf32> to vector<2x8xf32>
    %553 = vector.shape_cast %550 : vector<2x1xf32> to vector<2x1xf32>
    %554 = vector.broadcast %553 : vector<2x1xf32> to vector<2x8xf32>
    %555 = arith.select %435, %554, %552 : vector<2x8xi1>, vector<2x8xf32>
    %556 = vector.shape_cast %500 : vector<2x1xf32> to vector<2x1xf32>
    %557 = vector.broadcast %556 : vector<2x1xf32> to vector<2x8xf32>
    %558 = arith.select %437, %557, %555 : vector<2x8xi1>, vector<2x8xf32>
    %559 = vector.shape_cast %432 : vector<2x1xf32> to vector<2x1xf32>
    %560 = vector.broadcast %559 : vector<2x1xf32> to vector<2x8xf32>
    %561 = arith.select %439, %560, %558 : vector<2x8xi1>, vector<2x8xf32>
    %562 = vector.shape_cast %445 : vector<2x1xf32> to vector<2x1xf32>
    %563 = vector.broadcast %562 : vector<2x1xf32> to vector<2x8xf32>
    %564 = arith.select %441, %563, %561 : vector<2x8xi1>, vector<2x8xf32>
    %565 = vector.shape_cast %448 : vector<2x1xf32> to vector<2x1xf32>
    %566 = vector.broadcast %565 : vector<2x1xf32> to vector<2x8xf32>
    %567 = arith.select %443, %566, %564 : vector<2x8xi1>, vector<2x8xf32>
    %568 = tpu.concatenate %567, %546 in 1 : vector<2x8xf32>, vector<2x32xf32> -> vector<2x40xf32>
    %569 = arith.truncf %568 : vector<2x40xf32> to vector<2x40xbf16>
    %cst_125 = arith.constant dense<0.000000e+00> : vector<2x128xf32>
    %570 = tpu.matmul %569, %0, %cst_125 {dimension_numbers = #tpu.dot_dimension_numbers<[1], [0], [0], [1], [0, 0, 1, 1], [], []>} : vector<2x40xbf16>, vector<40x128xbf16>, vector<2x128xf32> -> vector<2x128xf32>
    %571 = arith.addf %570, %5 : vector<2x128xf32>
    %572 = vector.extract_strided_slice %571 {offsets = [0, 0], sizes = [2, 32], strides = [1, 1]} : vector<2x128xf32> to vector<2x32xf32>
    %573 = arith.negf %572 : vector<2x32xf32>
    %574 = math.exp %573 : vector<2x32xf32>
    %cst_126 = arith.constant 1.000000e+00 : f32
    %575 = vector.broadcast %cst_126 : f32 to vector<2x32xf32>
    %576 = arith.addf %575, %574 : vector<2x32xf32>
    %577 = arith.divf %575, %576 : vector<2x32xf32>
    %578 = vector.extract_strided_slice %571 {offsets = [0, 32], sizes = [2, 32], strides = [1, 1]} : vector<2x128xf32> to vector<2x32xf32>
    %579 = arith.negf %578 : vector<2x32xf32>
    %580 = math.exp %579 : vector<2x32xf32>
    %cst_127 = arith.constant 1.000000e+00 : f32
    %581 = vector.broadcast %cst_127 : f32 to vector<2x32xf32>
    %582 = arith.addf %581, %580 : vector<2x32xf32>
    %583 = arith.divf %581, %582 : vector<2x32xf32>
    %584 = vector.extract_strided_slice %571 {offsets = [0, 64], sizes = [2, 32], strides = [1, 1]} : vector<2x128xf32> to vector<2x32xf32>
    %585 = math.tanh %584 : vector<2x32xf32>
    %586 = vector.extract_strided_slice %571 {offsets = [0, 96], sizes = [2, 32], strides = [1, 1]} : vector<2x128xf32> to vector<2x32xf32>
    %587 = arith.negf %586 : vector<2x32xf32>
    %588 = math.exp %587 : vector<2x32xf32>
    %cst_128 = arith.constant 1.000000e+00 : f32
    %589 = vector.broadcast %cst_128 : f32 to vector<2x32xf32>
    %590 = arith.addf %589, %588 : vector<2x32xf32>
    %591 = arith.divf %589, %590 : vector<2x32xf32>
    %592 = arith.mulf %583, %544 : vector<2x32xf32>
    %593 = arith.mulf %577, %585 : vector<2x32xf32>
    %594 = arith.addf %592, %593 : vector<2x32xf32>
    %595 = math.tanh %594 : vector<2x32xf32>
    %596 = arith.mulf %591, %595 : vector<2x32xf32>
    %597 = arith.mulf %596, %12 : vector<2x32xf32>
    %cst_129 = arith.constant dense<0.000000e+00> : vector<2xf32>
    %598 = vector.multi_reduction <add>, %597, %cst_129 [1] : vector<2x32xf32> to vector<2xf32>
    %599 = vector.shape_cast %598 : vector<2xf32> to vector<2x1xf32>
    %600 = arith.addf %599, %8 : vector<2x1xf32>
    %c0_130 = arith.constant 0 : index
    %c15 = arith.constant 15 : index
    %c0_131 = arith.constant 0 : index
    %601 = vector.load %arg1[%c0_130, %c15, %c0_131] : memref<2x16x8xf32, #tpu.memory_space<vmem>>, vector<2x1x8xf32>
    %602 = vector.shape_cast %601 : vector<2x1x8xf32> to vector<2x8xf32>
    %603 = vector.shape_cast %600 : vector<2x1xf32> to vector<2x1xf32>
    %604 = vector.broadcast %603 : vector<2x1xf32> to vector<2x8xf32>
    %605 = arith.select %435, %604, %602 : vector<2x8xi1>, vector<2x8xf32>
    %606 = vector.shape_cast %550 : vector<2x1xf32> to vector<2x1xf32>
    %607 = vector.broadcast %606 : vector<2x1xf32> to vector<2x8xf32>
    %608 = arith.select %437, %607, %605 : vector<2x8xi1>, vector<2x8xf32>
    %609 = vector.shape_cast %500 : vector<2x1xf32> to vector<2x1xf32>
    %610 = vector.broadcast %609 : vector<2x1xf32> to vector<2x8xf32>
    %611 = arith.select %439, %610, %608 : vector<2x8xi1>, vector<2x8xf32>
    %612 = vector.shape_cast %444 : vector<2x1xf32> to vector<2x1xf32>
    %613 = vector.broadcast %612 : vector<2x1xf32> to vector<2x8xf32>
    %614 = arith.select %441, %613, %611 : vector<2x8xi1>, vector<2x8xf32>
    %615 = vector.shape_cast %447 : vector<2x1xf32> to vector<2x1xf32>
    %616 = vector.broadcast %615 : vector<2x1xf32> to vector<2x8xf32>
    %617 = arith.select %443, %616, %614 : vector<2x8xi1>, vector<2x8xf32>
    %618 = tpu.concatenate %617, %596 in 1 : vector<2x8xf32>, vector<2x32xf32> -> vector<2x40xf32>
    %619 = arith.truncf %618 : vector<2x40xf32> to vector<2x40xbf16>
    %cst_132 = arith.constant dense<0.000000e+00> : vector<2x128xf32>
    %620 = tpu.matmul %619, %0, %cst_132 {dimension_numbers = #tpu.dot_dimension_numbers<[1], [0], [0], [1], [0, 0, 1, 1], [], []>} : vector<2x40xbf16>, vector<40x128xbf16>, vector<2x128xf32> -> vector<2x128xf32>
    %621 = arith.addf %620, %5 : vector<2x128xf32>
    %622 = vector.extract_strided_slice %621 {offsets = [0, 0], sizes = [2, 32], strides = [1, 1]} : vector<2x128xf32> to vector<2x32xf32>
    %623 = arith.negf %622 : vector<2x32xf32>
    %624 = math.exp %623 : vector<2x32xf32>
    %cst_133 = arith.constant 1.000000e+00 : f32
    %625 = vector.broadcast %cst_133 : f32 to vector<2x32xf32>
    %626 = arith.addf %625, %624 : vector<2x32xf32>
    %627 = arith.divf %625, %626 : vector<2x32xf32>
    %628 = vector.extract_strided_slice %621 {offsets = [0, 32], sizes = [2, 32], strides = [1, 1]} : vector<2x128xf32> to vector<2x32xf32>
    %629 = arith.negf %628 : vector<2x32xf32>
    %630 = math.exp %629 : vector<2x32xf32>
    %cst_134 = arith.constant 1.000000e+00 : f32
    %631 = vector.broadcast %cst_134 : f32 to vector<2x32xf32>
    %632 = arith.addf %631, %630 : vector<2x32xf32>
    %633 = arith.divf %631, %632 : vector<2x32xf32>
    %634 = vector.extract_strided_slice %621 {offsets = [0, 64], sizes = [2, 32], strides = [1, 1]} : vector<2x128xf32> to vector<2x32xf32>
    %635 = math.tanh %634 : vector<2x32xf32>
    %636 = vector.extract_strided_slice %621 {offsets = [0, 96], sizes = [2, 32], strides = [1, 1]} : vector<2x128xf32> to vector<2x32xf32>
    %637 = arith.negf %636 : vector<2x32xf32>
    %638 = math.exp %637 : vector<2x32xf32>
    %cst_135 = arith.constant 1.000000e+00 : f32
    %639 = vector.broadcast %cst_135 : f32 to vector<2x32xf32>
    %640 = arith.addf %639, %638 : vector<2x32xf32>
    %641 = arith.divf %639, %640 : vector<2x32xf32>
    %642 = arith.mulf %633, %594 : vector<2x32xf32>
    %643 = arith.mulf %627, %635 : vector<2x32xf32>
    %644 = arith.addf %642, %643 : vector<2x32xf32>
    %645 = math.tanh %644 : vector<2x32xf32>
    %646 = arith.mulf %641, %645 : vector<2x32xf32>
    %647 = arith.mulf %646, %12 : vector<2x32xf32>
    %cst_136 = arith.constant dense<0.000000e+00> : vector<2xf32>
    %648 = vector.multi_reduction <add>, %647, %cst_136 [1] : vector<2x32xf32> to vector<2xf32>
    %649 = vector.shape_cast %648 : vector<2xf32> to vector<2x1xf32>
    %650 = arith.addf %649, %8 : vector<2x1xf32>
    %651 = tpu.concatenate %47, %82, %117, %152, %187, %222, %257, %292, %327, %362, %397, %432, %500, %550, %600, %650 in 1 : vector<2x1xf32>, vector<2x1xf32>, vector<2x1xf32>, vector<2x1xf32>, vector<2x1xf32>, vector<2x1xf32>, vector<2x1xf32>, vector<2x1xf32>, vector<2x1xf32>, vector<2x1xf32>, vector<2x1xf32>, vector<2x1xf32>, vector<2x1xf32>, vector<2x1xf32>, vector<2x1xf32>, vector<2x1xf32> -> vector<2x16xf32>
    %cst_137 = arith.constant 0.000000e+00 : f32
    %652 = vector.broadcast %cst_137 : f32 to vector<2x112xf32>
    %653 = tpu.concatenate %651, %652 in 1 : vector<2x16xf32>, vector<2x112xf32> -> vector<2x128xf32>
    %654 = vector.broadcast %2 : vector<2x1xf32> to vector<2x128xf32>
    %655 = arith.mulf %653, %654 : vector<2x128xf32>
    %c0_138 = arith.constant 0 : index
    %c0_139 = arith.constant 0 : index
    %656 = vector.load %arg8[%c0_138, %c0_139] : memref<2x128xf32, #tpu.memory_space<vmem>>, vector<2x128xf32>
    tpu.vector_store %arg8[%c0_138, %c0_139], %655 {strides = array<i32>} : memref<2x128xf32, #tpu.memory_space<vmem>>, vector<2x128xf32>,
    return
  }
  func.func @transform_0(%arg0: i32) -> (i32, i32, i32) {
    %c0_i32 = arith.constant 0 : i32
    %c0_i32_0 = arith.constant 0 : i32
    %c0_i32_1 = arith.constant 0 : i32
    return %arg0, %c0_i32, %c0_i32_0 : i32, i32, i32
  }
  func.func @transform_1(%arg0: i32) -> (i32, i32) {
    %c0_i32 = arith.constant 0 : i32
    %c0_i32_0 = arith.constant 0 : i32
    return %arg0, %c0_i32 : i32, i32
  }
  func.func @transform_2(%arg0: i32) -> (i32, i32) {
    %c0_i32 = arith.constant 0 : i32
    %c0_i32_0 = arith.constant 0 : i32
    return %arg0, %c0_i32 : i32, i32
  }
  func.func @transform_3(%arg0: i32) -> (i32, i32) {
    %c0_i32 = arith.constant 0 : i32
    %c0_i32_0 = arith.constant 0 : i32
    %c0_i32_1 = arith.constant 0 : i32
    return %c0_i32, %c0_i32_0 : i32, i32
  }
  func.func @transform_4(%arg0: i32) -> (i32, i32) {
    %c0_i32 = arith.constant 0 : i32
    %c0_i32_0 = arith.constant 0 : i32
    %c0_i32_1 = arith.constant 0 : i32
    return %c0_i32, %c0_i32_0 : i32, i32
  }
  func.func @transform_5(%arg0: i32) -> (i32, i32) {
    %c0_i32 = arith.constant 0 : i32
    %c0_i32_0 = arith.constant 0 : i32
    %c0_i32_1 = arith.constant 0 : i32
    return %c0_i32, %c0_i32_0 : i32, i32
  }
  func.func @transform_6(%arg0: i32) -> (i32, i32) {
    %c0_i32 = arith.constant 0 : i32
    %c0_i32_0 = arith.constant 0 : i32
    %c0_i32_1 = arith.constant 0 : i32
    return %c0_i32, %c0_i32_0 : i32, i32
  }
  func.func @transform_7(%arg0: i32) -> (i32, i32) {
    %c0_i32 = arith.constant 0 : i32
    %c0_i32_0 = arith.constant 0 : i32
    return %arg0, %c0_i32 : i32, i32
  }
}

</mosaic_0001>

<llo_original>
// kernel: tpu_custom_call.1
$region0: #{tpu_custom_call.1}
  #allocation0 [shape = 'u32[]', space=smem, size = 0x4, offset = 0x4, fixed_abs, tag = 'smem constant byte address 0x4 - core index']
  #allocation1 [shape = 'u32[144,128]{1,0:T(1,128)}', space=vmem, size = 0x12000, scoped, tag = 'internal scratch']
  #allocation2 [shape = 'f32[1,1]{1,0:T(1,128)S(1)}', space=vmem, size = 0x200, scoped, tag = 'scoped memory for tpu_custom_call.1']
  %s0 = inlined_call_operand.vmem [shape: f32[2,16,8], index: 0, kind: input, shape index: {}]
  %s1 = inlined_call_operand.vmem [shape: f32[2,7], index: 1, kind: input, shape index: {}]
  %s2 = inlined_call_operand.vmem [shape: f32[2,1], index: 2, kind: input, shape index: {}]
  %s3 = inlined_call_operand.vmem [shape: bf16[40,128], index: 3, kind: input, shape index: {}]
  %s4 = inlined_call_operand.vmem [shape: f32[1,128], index: 4, kind: input, shape index: {}]
  %s5 = inlined_call_operand.vmem [shape: f32[1,32], index: 5, kind: input, shape index: {}]
  %s6 = inlined_call_operand.<no memory space> [shape: f32[1,1], index: 6, kind: input, shape index: {}]
  %s7 = inlined_call_operand.hbm [shape: f32[2,128], index: 7, kind: output, shape index: {}]
  %s8 = sld [smem:[#allocation0]]
  $region38: #{tpu_custom_call.1} parent=0
    _
  %s10 = ssub.s32 1, %s8
  %s11 = scalar_select 0, %s10, %s8
  %v12 = vstv %s6
  %13 = vst [vmem:[#allocation2] sm:$0x1] %v12
  $region1: #{tpu_custom_call.1} parent=0
    #allocation3 [shape = 'u8[1024]{0}', space=vmem, size = 0x400, scoped, tag = 'output window, operand 0, single buffered']
    #allocation4 [shape = 's32[1]{0}', space=sflag, size = 0x4, scoped, tag = 'scoped memory for tpu_custom_call.1']
    %14 = vsyncpa [#allocation4], 0
    // Predicated region
    $region2: #{tpu_custom_call.1} parent=1 // pred_check
      _
    $region3: #{tpu_custom_call.1} parent=1 // pred_check_branch
      %16 = sbr.rel (0) target = $region5
    $region4: #{tpu_custom_call.1} parent=1 // pred_region
      _
    $region5: #{tpu_custom_call.1} parent=1 // pred_fallthru
      _
    // Predicated region
    $region6: #{tpu_custom_call.1} parent=1 // pred_check
      _
    $region7: #{tpu_custom_call.1} parent=1 // pred_check_branch
      %18 = sbr.rel (0) target = $region9
    $region8: #{tpu_custom_call.1} parent=1 // pred_region
      _
    $region9: #{tpu_custom_call.1} parent=1 // pred_fallthru
      _
    // Predicated region
    $region10: #{tpu_custom_call.1} parent=1 // pred_check
      _
    $region11: #{tpu_custom_call.1} parent=1 // pred_check_branch
      %20 = sbr.rel (0) target = $region13
    $region12: #{tpu_custom_call.1} parent=1 // pred_region
      _
    $region13: #{tpu_custom_call.1} parent=1 // pred_fallthru
      _
    // Predicated region
    $region14: #{tpu_custom_call.1} parent=1 // pred_check
      _
    $region15: #{tpu_custom_call.1} parent=1 // pred_check_branch
      %22 = sbr.rel (0) target = $region17
    $region16: #{tpu_custom_call.1} parent=1 // pred_region
      _
    $region17: #{tpu_custom_call.1} parent=1 // pred_fallthru
      _
    // Predicated region
    $region18: #{tpu_custom_call.1} parent=1 // pred_check
      _
    $region19: #{tpu_custom_call.1} parent=1 // pred_check_branch
      %24 = sbr.rel (0) target = $region21
    $region20: #{tpu_custom_call.1} parent=1 // pred_region
      _
    $region21: #{tpu_custom_call.1} parent=1 // pred_fallthru
      _
    // Predicated region
    $region22: #{tpu_custom_call.1} parent=1 // pred_check
      _
    $region23: #{tpu_custom_call.1} parent=1 // pred_check_branch
      %26 = sbr.rel (0) target = $region25
    $region24: #{tpu_custom_call.1} parent=1 // pred_region
      _
    $region25: #{tpu_custom_call.1} parent=1 // pred_fallthru
      _
    // Predicated region
    $region26: #{tpu_custom_call.1} parent=1 // pred_check
      _
    $region27: #{tpu_custom_call.1} parent=1 // pred_check_branch
      %28 = sbr.rel (0) target = $region29
    $region28: #{tpu_custom_call.1} parent=1 // pred_region
      _
    $region29: #{tpu_custom_call.1} parent=1 // pred_fallthru
      _
    %v30 = vld [vmem:[%s3] sm:$0xf]
    %v31 = vld [vmem:[%s3 + $0x4] sm:$0xf]
    %v32 = vld [vmem:[%s3 + $0x8] sm:$0xf]
    %v33 = vld [vmem:[%s3 + $0xc] sm:$0xf]
    %v34 = vld [vmem:[%s3 + $0x10] sm:$0xf]
    %v35 = vld [vmem:[%s5] sm:$0x1]
    %v36 = vld [vmem:[%s2] sm:$0x3]
    %v37 = vld [vmem:[%s4] sm:$0x1]
    %v39 = vlaneseq
    %v40 = vshrl.u32 %v39, 7
    %v41 = vsub.s32 0, %v40
    %v42 = vrot.slane %v37, %v41
    %v44 = vld [vmem:[#allocation2] sm:$0x1]
    %v46 = vlaneseq
    %v47 = vshrl.u32 %v46, 7
    %v48 = vsub.s32 0, %v47
    %v49 = vrot.slane %v44, %v48
    %v52 = vlaneseq
    %v53 = vshrl.u32 %v52, 7
    %v54 = vsub.s32 0, %v53
    %v55 = vrot.slane %v35, %v54
    %v56 = vld [vmem:[%s0] sm:$0x1]
    %v57 = vld [vmem:[%s0 + $0x10] sm:$0x1]
    %v60 = vrot.slane %v57, 7
    %vm61 = vcmask 1041409
    %v62 = vsel %vm61, %v60, %v56
    %vm64 = vcmask 64512
    %v65 = vsel %vm64, %v62, 0.0
    %v66 = vpack.c.bf16 %v65, %v65
    %v72 = vunpack.c.l.b16 %v30
    %v73 = vunpack.c.l.b16 %v31
    %v74 = vunpack.c.l.b16 %v32
    %v75 = vunpack.c.l.b16 %v33
    %v76 = vunpack.c.l.b16 %v34
    %v77 = vpack.c.b16 %v73, %v72
    %v78 = vpack.c.b16 %v75, %v74
    %v79 = vpack.c.b16 %v76, %v76
    %vm82 = vcmask 326656
    %v84 = vsel %vm82, %v66, 0
    %vm86 = vcmask 1043456
    %v88 = vsel %vm86, %v79, 0
    %90 = vmatprep.subr.bf16.mxu0 0
    %91 = vmatpush1.bf16.msra.mxu0 %v77
    %92 = vmatprep.subr.bf16.mxu0 0
    %93 = vmatpush1.bf16.msra.mxu0 %v78
    %94 = vmatprep.subr.bf16.mxu0 0
    %95 = vmatpush1.bf16.msra.mxu0 %v88
    %96 = vmatprep.subr.bf16.mxu0 0
    %97 = vmatpush1.bf16.msra.mxu0 0
    %98 = vmatprep.subr.bf16.mxu0 0
    %99 = vmatpush1.bf16.msra.mxu0 0
    %100 = vmatprep.subr.bf16.mxu0 0
    %101 = vmatpush1.bf16.msra.mxu0 0
    %102 = vmatprep.subr.bf16.mxu0 0
    %103 = vmatpush1.bf16.msra.mxu0 0
    %104 = vmatprep.subr.bf16.mxu0 0
    %105 = vmatpush1.bf16.msra.mxu0 0
    %106 = vmatprep.subr.bf16.mxu0 0
    %107 = vmatpush1.bf16.msra.mxu0 0
    %108 = vmatprep.subr.bf16.mxu0 0
    %109 = vmatpush1.bf16.msra.mxu0 0
    %110 = vmatprep.subr.bf16.mxu0 0
    %111 = vmatpush1.bf16.msra.mxu0 0
    %112 = vmatprep.subr.bf16.mxu0 0
    %113 = vmatpush1.bf16.msra.mxu0 0
    %114 = vmatprep.subr.bf16.mxu0 0
    %115 = vmatpush1.bf16.msra.mxu0 0
    %116 = vmatprep.subr.bf16.mxu0 0
    %117 = vmatpush1.bf16.msra.mxu0 0
    %118 = vmatprep.subr.bf16.mxu0 0
    %119 = vmatpush1.bf16.msra.mxu0 0
    %120 = vmatprep.subr.bf16.mxu0 0
    %121 = vmatpush1.bf16.msra.mxu0 0
    %122 = vmatprep.mubr.bf16.mxu0 0
    %123 = vmatmul.mubr.bf16.gmra.mrb[0].mxu0 %v84
    %v124 = vpop.f32.mrb[0].mxu0
    %v125 = vadd.f32 %v42, %v124
    %v126 = vpop.f32.mrb[0].mxu0
    %v127 = vpop.f32.mrb[0].mxu0
    %v128 = vpop.f32.mrb[0].mxu0
    %129 = vdwg.mxu0
    %v130 = vxor.u32 %v125, 2147483648
    %v131 = vmul.f32 %v130, 1.442695
    %v132 = vpow.pop %v131
    %v133 = vadd.f32 %v132, 1.0
    %v134 = vrcp.pop %v133
    %v135 = vmul.f32 1.0, %v134
    %v136 = vtanh.pop %v125
    %v137 = vmul.f32 %v135, 0.0
    %139 = vrot.lane.b32.xlu0 %v136, 64
    %v140 = vpop.permute.xlu0 %139
    %v142 = vmul.f32 %v135, %v140
    %144 = vrot.lane.b32.xlu0 %v142, 32
    %v145 = vpop.permute.xlu0 %144
    %v147 = vadd.f32 %v137, %v145
    %v148 = vtanh.pop %v147
    %150 = vrot.lane.b32.xlu0 %v148, 64
    %v151 = vpop.permute.xlu0 %150
    %v153 = vmul.f32 %v135, %v151
    %154 = vrot.lane.b32.xlu0 %v55, 96
    %v155 = vpop.permute.xlu0 %154
    %v157 = vmul.f32 %v153, %v155
    %159 = vrot.lane.b32.xlu0 %v157, 32
    %v160 = vpop.permute.xlu0 %159
    %vm162 = vcmask 254976
    %v163 = vsel %vm162, %v160, 0.0
    %164 = vadd.xlane.f32.xlu0 %v163
    %v165 = vpop.xlane.xlu0 %164
    %v166 = vadd.f32 %v165, %v49
    %v167 = vld [vmem:[%s0 + $0x1] sm:$0x1]
    %v168 = vld [vmem:[%s0 + $0x11] sm:$0x1]
    %v171 = vrot.slane %v168, 7
    %v172 = vsel %vm61, %v171, %v167
    %175 = vrot.lane.b32.xlu0 %v153, 40
    %v176 = vpop.permute.xlu0 %175
    %v178 = vsel %vm64, %v172, %v176
    %v179 = vpack.c.bf16 %v178, %v178
    %v181 = vsel %vm82, %v179, 0
    %183 = vmatprep.subr.bf16.mxu0 0
    %184 = vmatpush1.bf16.msra.mxu0 %v77
    %185 = vmatprep.subr.bf16.mxu0 0
    %186 = vmatpush1.bf16.msra.mxu0 %v78
    %187 = vmatprep.subr.bf16.mxu0 0
    %188 = vmatpush1.bf16.msra.mxu0 %v88
    %189 = vmatprep.subr.bf16.mxu0 0
    %190 = vmatpush1.bf16.msra.mxu0 0
    %191 = vmatprep.subr.bf16.mxu0 0
    %192 = vmatpush1.bf16.msra.mxu0 0
    %193 = vmatprep.subr.bf16.mxu0 0
    %194 = vmatpush1.bf16.msra.mxu0 0
    %195 = vmatprep.subr.bf16.mxu0 0
    %196 = vmatpush1.bf16.msra.mxu0 0
    %197 = vmatprep.subr.bf16.mxu0 0
    %198 = vmatpush1.bf16.msra.mxu0 0
    %199 = vmatprep.subr.bf16.mxu0 0
    %200 = vmatpush1.bf16.msra.mxu0 0
    %201 = vmatprep.subr.bf16.mxu0 0
    %202 = vmatpush1.bf16.msra.mxu0 0
    %203 = vmatprep.subr.bf16.mxu0 0
    %204 = vmatpush1.bf16.msra.mxu0 0
    %205 = vmatprep.subr.bf16.mxu0 0
    %206 = vmatpush1.bf16.msra.mxu0 0
    %207 = vmatprep.subr.bf16.mxu0 0
    %208 = vmatpush1.bf16.msra.mxu0 0
    %209 = vmatprep.subr.bf16.mxu0 0
    %210 = vmatpush1.bf16.msra.mxu0 0
    %211 = vmatprep.subr.bf16.mxu0 0
    %212 = vmatpush1.bf16.msra.mxu0 0
    %213 = vmatprep.subr.bf16.mxu0 0
    %214 = vmatpush1.bf16.msra.mxu0 0
    %215 = vmatprep.mubr.bf16.mxu0 0
    %216 = vmatmul.mubr.bf16.gmra.mrb[0].mxu0 %v181
    %v217 = vpop.f32.mrb[0].mxu0
    %v218 = vadd.f32 %v42, %v217
    %v219 = vpop.f32.mrb[0].mxu0
    %v220 = vpop.f32.mrb[0].mxu0
    %v221 = vpop.f32.mrb[0].mxu0
    %222 = vdwg.mxu0
    %v223 = vxor.u32 %v218, 2147483648
    %v224 = vmul.f32 %v223, 1.442695
    %v225 = vpow.pop %v224
    %v226 = vadd.f32 %v225, 1.0
    %v227 = vrcp.pop %v226
    %v228 = vmul.f32 1.0, %v227
    %v229 = vtanh.pop %v218
    %v230 = vmul.f32 %v228, %v147
    %232 = vrot.lane.b32.xlu0 %v229, 64
    %v233 = vpop.permute.xlu0 %232
    %v235 = vmul.f32 %v228, %v233
    %237 = vrot.lane.b32.xlu0 %v235, 32
    %v238 = vpop.permute.xlu0 %237
    %v240 = vadd.f32 %v230, %v238
    %v241 = vtanh.pop %v240
    %243 = vrot.lane.b32.xlu0 %v241, 64
    %v244 = vpop.permute.xlu0 %243
    %v246 = vmul.f32 %v228, %v244
    %v247 = vmul.f32 %v246, %v155
    %249 = vrot.lane.b32.xlu0 %v247, 32
    %v250 = vpop.permute.xlu0 %249
    %v252 = vsel %vm162, %v250, 0.0
    %253 = vadd.xlane.f32.xlu0 %v252
    %v254 = vpop.xlane.xlu0 %253
    %v255 = vadd.f32 %v254, %v49
    %v256 = vld [vmem:[%s0 + $0x2] sm:$0x1]
    %v257 = vld [vmem:[%s0 + $0x12] sm:$0x1]
    %v260 = vrot.slane %v257, 7
    %v261 = vsel %vm61, %v260, %v256
    %264 = vrot.lane.b32.xlu0 %v246, 40
    %v265 = vpop.permute.xlu0 %264
    %v267 = vsel %vm64, %v261, %v265
    %v268 = vpack.c.bf16 %v267, %v267
    %v270 = vsel %vm82, %v268, 0
    %272 = vmatprep.subr.bf16.mxu0 0
    %273 = vmatpush1.bf16.msra.mxu0 %v77
    %274 = vmatprep.subr.bf16.mxu0 0
    %275 = vmatpush1.bf16.msra.mxu0 %v78
    %276 = vmatprep.subr.bf16.mxu0 0
    %277 = vmatpush1.bf16.msra.mxu0 %v88
    %278 = vmatprep.subr.bf16.mxu0 0
    %279 = vmatpush1.bf16.msra.mxu0 0
    %280 = vmatprep.subr.bf16.mxu0 0
    %281 = vmatpush1.bf16.msra.mxu0 0
    %282 = vmatprep.subr.bf16.mxu0 0
    %283 = vmatpush1.bf16.msra.mxu0 0
    %284 = vmatprep.subr.bf16.mxu0 0
    %285 = vmatpush1.bf16.msra.mxu0 0
    %286 = vmatprep.subr.bf16.mxu0 0
    %287 = vmatpush1.bf16.msra.mxu0 0
    %288 = vmatprep.subr.bf16.mxu0 0
    %289 = vmatpush1.bf16.msra.mxu0 0
    %290 = vmatprep.subr.bf16.mxu0 0
    %291 = vmatpush1.bf16.msra.mxu0 0
    %292 = vmatprep.subr.bf16.mxu0 0
    %293 = vmatpush1.bf16.msra.mxu0 0
    %294 = vmatprep.subr.bf16.mxu0 0
    %295 = vmatpush1.bf16.msra.mxu0 0
    %296 = vmatprep.subr.bf16.mxu0 0
    %297 = vmatpush1.bf16.msra.mxu0 0
    %298 = vmatprep.subr.bf16.mxu0 0
    %299 = vmatpush1.bf16.msra.mxu0 0
    %300 = vmatprep.subr.bf16.mxu0 0
    %301 = vmatpush1.bf16.msra.mxu0 0
    %302 = vmatprep.subr.bf16.mxu0 0
    %303 = vmatpush1.bf16.msra.mxu0 0
    %304 = vmatprep.mubr.bf16.mxu0 0
    %305 = vmatmul.mubr.bf16.gmra.mrb[0].mxu0 %v270
    %v306 = vpop.f32.mrb[0].mxu0
    %v307 = vadd.f32 %v42, %v306
    %v308 = vpop.f32.mrb[0].mxu0
    %v309 = vpop.f32.mrb[0].mxu0
    %v310 = vpop.f32.mrb[0].mxu0
    %311 = vdwg.mxu0
    %v312 = vxor.u32 %v307, 2147483648
    %v313 = vmul.f32 %v312, 1.442695
    %v314 = vpow.pop %v313
    %v315 = vadd.f32 %v314, 1.0
    %v316 = vrcp.pop %v315
    %v317 = vmul.f32 1.0, %v316
    %v318 = vtanh.pop %v307
    %v319 = vmul.f32 %v317, %v240
    %321 = vrot.lane.b32.xlu0 %v318, 64
    %v322 = vpop.permute.xlu0 %321
    %v324 = vmul.f32 %v317, %v322
    %326 = vrot.lane.b32.xlu0 %v324, 32
    %v327 = vpop.permute.xlu0 %326
    %v329 = vadd.f32 %v319, %v327
    %v330 = vtanh.pop %v329
    %332 = vrot.lane.b32.xlu0 %v330, 64
    %v333 = vpop.permute.xlu0 %332
    %v335 = vmul.f32 %v317, %v333
    %v336 = vmul.f32 %v335, %v155
    %338 = vrot.lane.b32.xlu0 %v336, 32
    %v339 = vpop.permute.xlu0 %338
    %v341 = vsel %vm162, %v339, 0.0
    %342 = vadd.xlane.f32.xlu0 %v341
    %v343 = vpop.xlane.xlu0 %342
    %v344 = vadd.f32 %v343, %v49
    %v345 = vld [vmem:[%s0 + $0x3] sm:$0x1]
    %v346 = vld [vmem:[%s0 + $0x13] sm:$0x1]
    %v349 = vrot.slane %v346, 7
    %v350 = vsel %vm61, %v349, %v345
    %353 = vrot.lane.b32.xlu0 %v335, 40
    %v354 = vpop.permute.xlu0 %353
    %v356 = vsel %vm64, %v350, %v354
    %v357 = vpack.c.bf16 %v356, %v356
    %v359 = vsel %vm82, %v357, 0
    %361 = vmatprep.subr.bf16.mxu0 0
    %362 = vmatpush1.bf16.msra.mxu0 %v77
    %363 = vmatprep.subr.bf16.mxu0 0
    %364 = vmatpush1.bf16.msra.mxu0 %v78
    %365 = vmatprep.subr.bf16.mxu0 0
    %366 = vmatpush1.bf16.msra.mxu0 %v88
    %367 = vmatprep.subr.bf16.mxu0 0
    %368 = vmatpush1.bf16.msra.mxu0 0
    %369 = vmatprep.subr.bf16.mxu0 0
    %370 = vmatpush1.bf16.msra.mxu0 0
    %371 = vmatprep.subr.bf16.mxu0 0
    %372 = vmatpush1.bf16.msra.mxu0 0
    %373 = vmatprep.subr.bf16.mxu0 0
    %374 = vmatpush1.bf16.msra.mxu0 0
    %375 = vmatprep.subr.bf16.mxu0 0
    %376 = vmatpush1.bf16.msra.mxu0 0
    %377 = vmatprep.subr.bf16.mxu0 0
    %378 = vmatpush1.bf16.msra.mxu0 0
    %379 = vmatprep.subr.bf16.mxu0 0
    %380 = vmatpush1.bf16.msra.mxu0 0
    %381 = vmatprep.subr.bf16.mxu0 0
    %382 = vmatpush1.bf16.msra.mxu0 0
    %383 = vmatprep.subr.bf16.mxu0 0
    %384 = vmatpush1.bf16.msra.mxu0 0
    %385 = vmatprep.subr.bf16.mxu0 0
    %386 = vmatpush1.bf16.msra.mxu0 0
    %387 = vmatprep.subr.bf16.mxu0 0
    %388 = vmatpush1.bf16.msra.mxu0 0
    %389 = vmatprep.subr.bf16.mxu0 0
    %390 = vmatpush1.bf16.msra.mxu0 0
    %391 = vmatprep.subr.bf16.mxu0 0
    %392 = vmatpush1.bf16.msra.mxu0 0
    %393 = vmatprep.mubr.bf16.mxu0 0
    %394 = vmatmul.mubr.bf16.gmra.mrb[0].mxu0 %v359
    %v395 = vpop.f32.mrb[0].mxu0
    %v396 = vadd.f32 %v42, %v395
    %v397 = vpop.f32.mrb[0].mxu0
    %v398 = vpop.f32.mrb[0].mxu0
    %v399 = vpop.f32.mrb[0].mxu0
    %400 = vdwg.mxu0
    %v401 = vxor.u32 %v396, 2147483648
    %v402 = vmul.f32 %v401, 1.442695
    %v403 = vpow.pop %v402
    %v404 = vadd.f32 %v403, 1.0
    %v405 = vrcp.pop %v404
    %v406 = vmul.f32 1.0, %v405
    %v407 = vtanh.pop %v396
    %v408 = vmul.f32 %v406, %v329
    %410 = vrot.lane.b32.xlu0 %v407, 64
    %v411 = vpop.permute.xlu0 %410
    %v413 = vmul.f32 %v406, %v411
    %415 = vrot.lane.b32.xlu0 %v413, 32
    %v416 = vpop.permute.xlu0 %415
    %v418 = vadd.f32 %v408, %v416
    %v419 = vtanh.pop %v418
    %421 = vrot.lane.b32.xlu0 %v419, 64
    %v422 = vpop.permute.xlu0 %421
    %v424 = vmul.f32 %v406, %v422
    %v425 = vmul.f32 %v424, %v155
    %427 = vrot.lane.b32.xlu0 %v425, 32
    %v428 = vpop.permute.xlu0 %427
    %v430 = vsel %vm162, %v428, 0.0
    %431 = vadd.xlane.f32.xlu0 %v430
    %v432 = vpop.xlane.xlu0 %431
    %v433 = vadd.f32 %v432, %v49
    %v434 = vld [vmem:[%s0 + $0x4] sm:$0x1]
    %v435 = vld [vmem:[%s0 + $0x14] sm:$0x1]
    %v438 = vrot.slane %v435, 7
    %v439 = vsel %vm61, %v438, %v434
    %442 = vrot.lane.b32.xlu0 %v424, 40
    %v443 = vpop.permute.xlu0 %442
    %v445 = vsel %vm64, %v439, %v443
    %v446 = vpack.c.bf16 %v445, %v445
    %v448 = vsel %vm82, %v446, 0
    %450 = vmatprep.subr.bf16.mxu0 0
    %451 = vmatpush1.bf16.msra.mxu0 %v77
    %452 = vmatprep.subr.bf16.mxu0 0
    %453 = vmatpush1.bf16.msra.mxu0 %v78
    %454 = vmatprep.subr.bf16.mxu0 0
    %455 = vmatpush1.bf16.msra.mxu0 %v88
    %456 = vmatprep.subr.bf16.mxu0 0
    %457 = vmatpush1.bf16.msra.mxu0 0
    %458 = vmatprep.subr.bf16.mxu0 0
    %459 = vmatpush1.bf16.msra.mxu0 0
    %460 = vmatprep.subr.bf16.mxu0 0
    %461 = vmatpush1.bf16.msra.mxu0 0
    %462 = vmatprep.subr.bf16.mxu0 0
    %463 = vmatpush1.bf16.msra.mxu0 0
    %464 = vmatprep.subr.bf16.mxu0 0
    %465 = vmatpush1.bf16.msra.mxu0 0
    %466 = vmatprep.subr.bf16.mxu0 0
    %467 = vmatpush1.bf16.msra.mxu0 0
    %468 = vmatprep.subr.bf16.mxu0 0
    %469 = vmatpush1.bf16.msra.mxu0 0
    %470 = vmatprep.subr.bf16.mxu0 0
    %471 = vmatpush1.bf16.msra.mxu0 0
    %472 = vmatprep.subr.bf16.mxu0 0
    %473 = vmatpush1.bf16.msra.mxu0 0
    %474 = vmatprep.subr.bf16.mxu0 0
    %475 = vmatpush1.bf16.msra.mxu0 0
    %476 = vmatprep.subr.bf16.mxu0 0
    %477 = vmatpush1.bf16.msra.mxu0 0
    %478 = vmatprep.subr.bf16.mxu0 0
    %479 = vmatpush1.bf16.msra.mxu0 0
    %480 = vmatprep.subr.bf16.mxu0 0
    %481 = vmatpush1.bf16.msra.mxu0 0
    %482 = vmatprep.mubr.bf16.mxu0 0
    %483 = vmatmul.mubr.bf16.gmra.mrb[0].mxu0 %v448
    %v484 = vpop.f32.mrb[0].mxu0
    %v485 = vadd.f32 %v42, %v484
    %v486 = vpop.f32.mrb[0].mxu0
    %v487 = vpop.f32.mrb[0].mxu0
    %v488 = vpop.f32.mrb[0].mxu0
    %489 = vdwg.mxu0
    %v490 = vxor.u32 %v485, 2147483648
    %v491 = vmul.f32 %v490, 1.442695
    %v492 = vpow.pop %v491
    %v493 = vadd.f32 %v492, 1.0
    %v494 = vrcp.pop %v493
    %v495 = vmul.f32 1.0, %v494
    %v496 = vtanh.pop %v485
    %v497 = vmul.f32 %v495, %v418
    %499 = vrot.lane.b32.xlu0 %v496, 64
    %v500 = vpop.permute.xlu0 %499
    %v502 = vmul.f32 %v495, %v500
    %504 = vrot.lane.b32.xlu0 %v502, 32
    %v505 = vpop.permute.xlu0 %504
    %v507 = vadd.f32 %v497, %v505
    %v508 = vtanh.pop %v507
    %510 = vrot.lane.b32.xlu0 %v508, 64
    %v511 = vpop.permute.xlu0 %510
    %v513 = vmul.f32 %v495, %v511
    %v514 = vmul.f32 %v513, %v155
    %516 = vrot.lane.b32.xlu0 %v514, 32
    %v517 = vpop.permute.xlu0 %516
    %v519 = vsel %vm162, %v517, 0.0
    %520 = vadd.xlane.f32.xlu0 %v519
    %v521 = vpop.xlane.xlu0 %520
    %v522 = vadd.f32 %v521, %v49
    %v523 = vld [vmem:[%s0 + $0x5] sm:$0x1]
    %v524 = vld [vmem:[%s0 + $0x15] sm:$0x1]
    %v527 = vrot.slane %v524, 7
    %v528 = vsel %vm61, %v527, %v523
    %531 = vrot.lane.b32.xlu0 %v513, 40
    %v532 = vpop.permute.xlu0 %531
    %v534 = vsel %vm64, %v528, %v532
    %v535 = vpack.c.bf16 %v534, %v534
    %v537 = vsel %vm82, %v535, 0
    %539 = vmatprep.subr.bf16.mxu0 0
    %540 = vmatpush1.bf16.msra.mxu0 %v77
    %541 = vmatprep.subr.bf16.mxu0 0
    %542 = vmatpush1.bf16.msra.mxu0 %v78
    %543 = vmatprep.subr.bf16.mxu0 0
    %544 = vmatpush1.bf16.msra.mxu0 %v88
    %545 = vmatprep.subr.bf16.mxu0 0
    %546 = vmatpush1.bf16.msra.mxu0 0
    %547 = vmatprep.subr.bf16.mxu0 0
    %548 = vmatpush1.bf16.msra.mxu0 0
    %549 = vmatprep.subr.bf16.mxu0 0
    %550 = vmatpush1.bf16.msra.mxu0 0
    %551 = vmatprep.subr.bf16.mxu0 0
    %552 = vmatpush1.bf16.msra.mxu0 0
    %553 = vmatprep.subr.bf16.mxu0 0
    %554 = vmatpush1.bf16.msra.mxu0 0
    %555 = vmatprep.subr.bf16.mxu0 0
    %556 = vmatpush1.bf16.msra.mxu0 0
    %557 = vmatprep.subr.bf16.mxu0 0
    %558 = vmatpush1.bf16.msra.mxu0 0
    %559 = vmatprep.subr.bf16.mxu0 0
    %560 = vmatpush1.bf16.msra.mxu0 0
    %561 = vmatprep.subr.bf16.mxu0 0
    %562 = vmatpush1.bf16.msra.mxu0 0
    %563 = vmatprep.subr.bf16.mxu0 0
    %564 = vmatpush1.bf16.msra.mxu0 0
    %565 = vmatprep.subr.bf16.mxu0 0
    %566 = vmatpush1.bf16.msra.mxu0 0
    %567 = vmatprep.subr.bf16.mxu0 0
    %568 = vmatpush1.bf16.msra.mxu0 0
    %569 = vmatprep.subr.bf16.mxu0 0
    %570 = vmatpush1.bf16.msra.mxu0 0
    %571 = vmatprep.mubr.bf16.mxu0 0
    %572 = vmatmul.mubr.bf16.gmra.mrb[0].mxu0 %v537
    %v573 = vpop.f32.mrb[0].mxu0
    %v574 = vadd.f32 %v42, %v573
    %v575 = vpop.f32.mrb[0].mxu0
    %v576 = vpop.f32.mrb[0].mxu0
    %v577 = vpop.f32.mrb[0].mxu0
    %578 = vdwg.mxu0
    %v579 = vxor.u32 %v574, 2147483648
    %v580 = vmul.f32 %v579, 1.442695
    %v581 = vpow.pop %v580
    %v582 = vadd.f32 %v581, 1.0
    %v583 = vrcp.pop %v582
    %v584 = vmul.f32 1.0, %v583
    %v585 = vtanh.pop %v574
    %v586 = vmul.f32 %v584, %v507
    %588 = vrot.lane.b32.xlu0 %v585, 64
    %v589 = vpop.permute.xlu0 %588
    %v591 = vmul.f32 %v584, %v589
    %593 = vrot.lane.b32.xlu0 %v591, 32
    %v594 = vpop.permute.xlu0 %593
    %v596 = vadd.f32 %v586, %v594
    %v597 = vtanh.pop %v596
    %599 = vrot.lane.b32.xlu0 %v597, 64
    %v600 = vpop.permute.xlu0 %599
    %v602 = vmul.f32 %v584, %v600
    %v603 = vmul.f32 %v602, %v155
    %605 = vrot.lane.b32.xlu0 %v603, 32
    %v606 = vpop.permute.xlu0 %605
    %v608 = vsel %vm162, %v606, 0.0
    %609 = vadd.xlane.f32.xlu0 %v608
    %v610 = vpop.xlane.xlu0 %609
    %v611 = vadd.f32 %v610, %v49
    %v612 = vld [vmem:[%s0 + $0x6] sm:$0x1]
    %v613 = vld [vmem:[%s0 + $0x16] sm:$0x1]
    %v616 = vrot.slane %v613, 7
    %v617 = vsel %vm61, %v616, %v612
    %620 = vrot.lane.b32.xlu0 %v602, 40
    %v621 = vpop.permute.xlu0 %620
    %v623 = vsel %vm64, %v617, %v621
    %v624 = vpack.c.bf16 %v623, %v623
    %v626 = vsel %vm82, %v624, 0
    %628 = vmatprep.subr.bf16.mxu0 0
    %629 = vmatpush1.bf16.msra.mxu0 %v77
    %630 = vmatprep.subr.bf16.mxu0 0
    %631 = vmatpush1.bf16.msra.mxu0 %v78
    %632 = vmatprep.subr.bf16.mxu0 0
    %633 = vmatpush1.bf16.msra.mxu0 %v88
    %634 = vmatprep.subr.bf16.mxu0 0
    %635 = vmatpush1.bf16.msra.mxu0 0
    %636 = vmatprep.subr.bf16.mxu0 0
    %637 = vmatpush1.bf16.msra.mxu0 0
    %638 = vmatprep.subr.bf16.mxu0 0
    %639 = vmatpush1.bf16.msra.mxu0 0
    %640 = vmatprep.subr.bf16.mxu0 0
    %641 = vmatpush1.bf16.msra.mxu0 0
    %642 = vmatprep.subr.bf16.mxu0 0
    %643 = vmatpush1.bf16.msra.mxu0 0
    %644 = vmatprep.subr.bf16.mxu0 0
    %645 = vmatpush1.bf16.msra.mxu0 0
    %646 = vmatprep.subr.bf16.mxu0 0
    %647 = vmatpush1.bf16.msra.mxu0 0
    %648 = vmatprep.subr.bf16.mxu0 0
    %649 = vmatpush1.bf16.msra.mxu0 0
    %650 = vmatprep.subr.bf16.mxu0 0
    %651 = vmatpush1.bf16.msra.mxu0 0
    %652 = vmatprep.subr.bf16.mxu0 0
    %653 = vmatpush1.bf16.msra.mxu0 0
    %654 = vmatprep.subr.bf16.mxu0 0
    %655 = vmatpush1.bf16.msra.mxu0 0
    %656 = vmatprep.subr.bf16.mxu0 0
    %657 = vmatpush1.bf16.msra.mxu0 0
    %658 = vmatprep.subr.bf16.mxu0 0
    %659 = vmatpush1.bf16.msra.mxu0 0
    %660 = vmatprep.mubr.bf16.mxu0 0
    %661 = vmatmul.mubr.bf16.gmra.mrb[0].mxu0 %v626
    %v662 = vpop.f32.mrb[0].mxu0
    %v663 = vadd.f32 %v42, %v662
    %v664 = vpop.f32.mrb[0].mxu0
    %v665 = vpop.f32.mrb[0].mxu0
    %v666 = vpop.f32.mrb[0].mxu0
    %667 = vdwg.mxu0
    %v668 = vxor.u32 %v663, 2147483648
    %v669 = vmul.f32 %v668, 1.442695
    %v670 = vpow.pop %v669
    %v671 = vadd.f32 %v670, 1.0
    %v672 = vrcp.pop %v671
    %v673 = vmul.f32 1.0, %v672
    %v674 = vtanh.pop %v663
    %v675 = vmul.f32 %v673, %v596
    %677 = vrot.lane.b32.xlu0 %v674, 64
    %v678 = vpop.permute.xlu0 %677
    %v680 = vmul.f32 %v673, %v678
    %682 = vrot.lane.b32.xlu0 %v680, 32
    %v683 = vpop.permute.xlu0 %682
    %v685 = vadd.f32 %v675, %v683
    %v686 = vtanh.pop %v685
    %688 = vrot.lane.b32.xlu0 %v686, 64
    %v689 = vpop.permute.xlu0 %688
    %v691 = vmul.f32 %v673, %v689
    %v692 = vmul.f32 %v691, %v155
    %694 = vrot.lane.b32.xlu0 %v692, 32
    %v695 = vpop.permute.xlu0 %694
    %v697 = vsel %vm162, %v695, 0.0
    %698 = vadd.xlane.f32.xlu0 %v697
    %v699 = vpop.xlane.xlu0 %698
    %v700 = vadd.f32 %v699, %v49
    %v701 = vld [vmem:[%s0 + $0x7] sm:$0x1]
    %v702 = vld [vmem:[%s0 + $0x17] sm:$0x1]
    %v705 = vrot.slane %v702, 7
    %v706 = vsel %vm61, %v705, %v701
    %709 = vrot.lane.b32.xlu0 %v691, 40
    %v710 = vpop.permute.xlu0 %709
    %v712 = vsel %vm64, %v706, %v710
    %v713 = vpack.c.bf16 %v712, %v712
    %v715 = vsel %vm82, %v713, 0
    %717 = vmatprep.subr.bf16.mxu0 0
    %718 = vmatpush1.bf16.msra.mxu0 %v77
    %719 = vmatprep.subr.bf16.mxu0 0
    %720 = vmatpush1.bf16.msra.mxu0 %v78
    %721 = vmatprep.subr.bf16.mxu0 0
    %722 = vmatpush1.bf16.msra.mxu0 %v88
    %723 = vmatprep.subr.bf16.mxu0 0
    %724 = vmatpush1.bf16.msra.mxu0 0
    %725 = vmatprep.subr.bf16.mxu0 0
    %726 = vmatpush1.bf16.msra.mxu0 0
    %727 = vmatprep.subr.bf16.mxu0 0
    %728 = vmatpush1.bf16.msra.mxu0 0
    %729 = vmatprep.subr.bf16.mxu0 0
    %730 = vmatpush1.bf16.msra.mxu0 0
    %731 = vmatprep.subr.bf16.mxu0 0
    %732 = vmatpush1.bf16.msra.mxu0 0
    %733 = vmatprep.subr.bf16.mxu0 0
    %734 = vmatpush1.bf16.msra.mxu0 0
    %735 = vmatprep.subr.bf16.mxu0 0
    %736 = vmatpush1.bf16.msra.mxu0 0
    %737 = vmatprep.subr.bf16.mxu0 0
    %738 = vmatpush1.bf16.msra.mxu0 0
    %739 = vmatprep.subr.bf16.mxu0 0
    %740 = vmatpush1.bf16.msra.mxu0 0
    %741 = vmatprep.subr.bf16.mxu0 0
    %742 = vmatpush1.bf16.msra.mxu0 0
    %743 = vmatprep.subr.bf16.mxu0 0
    %744 = vmatpush1.bf16.msra.mxu0 0
    %745 = vmatprep.subr.bf16.mxu0 0
    %746 = vmatpush1.bf16.msra.mxu0 0
    %747 = vmatprep.subr.bf16.mxu0 0
    %748 = vmatpush1.bf16.msra.mxu0 0
    %749 = vmatprep.mubr.bf16.mxu0 0
    %750 = vmatmul.mubr.bf16.gmra.mrb[0].mxu0 %v715
    %v751 = vpop.f32.mrb[0].mxu0
    %v752 = vadd.f32 %v42, %v751
    %v753 = vpop.f32.mrb[0].mxu0
    %v754 = vpop.f32.mrb[0].mxu0
    %v755 = vpop.f32.mrb[0].mxu0
    %756 = vdwg.mxu0
    %v757 = vxor.u32 %v752, 2147483648
    %v758 = vmul.f32 %v757, 1.442695
    %v759 = vpow.pop %v758
    %v760 = vadd.f32 %v759, 1.0
    %v761 = vrcp.pop %v760
    %v762 = vmul.f32 1.0, %v761
    %v763 = vtanh.pop %v752
    %v764 = vmul.f32 %v762, %v685
    %766 = vrot.lane.b32.xlu0 %v763, 64
    %v767 = vpop.permute.xlu0 %766
    %v769 = vmul.f32 %v762, %v767
    %771 = vrot.lane.b32.xlu0 %v769, 32
    %v772 = vpop.permute.xlu0 %771
    %v774 = vadd.f32 %v764, %v772
    %v775 = vtanh.pop %v774
    %777 = vrot.lane.b32.xlu0 %v775, 64
    %v778 = vpop.permute.xlu0 %777
    %v780 = vmul.f32 %v762, %v778
    %v781 = vmul.f32 %v780, %v155
    %783 = vrot.lane.b32.xlu0 %v781, 32
    %v784 = vpop.permute.xlu0 %783
    %v786 = vsel %vm162, %v784, 0.0
    %787 = vadd.xlane.f32.xlu0 %v786
    %v788 = vpop.xlane.xlu0 %787
    %v789 = vadd.f32 %v788, %v49
    %v790 = vld [vmem:[%s0 + $0x8] sm:$0x1]
    %v791 = vld [vmem:[%s0 + $0x18] sm:$0x1]
    %v794 = vrot.slane %v791, 7
    %v795 = vsel %vm61, %v794, %v790
    %798 = vrot.lane.b32.xlu0 %v780, 40
    %v799 = vpop.permute.xlu0 %798
    %v801 = vsel %vm64, %v795, %v799
    %v802 = vpack.c.bf16 %v801, %v801
    %v804 = vsel %vm82, %v802, 0
    %806 = vmatprep.subr.bf16.mxu0 0
    %807 = vmatpush1.bf16.msra.mxu0 %v77
    %808 = vmatprep.subr.bf16.mxu0 0
    %809 = vmatpush1.bf16.msra.mxu0 %v78
    %810 = vmatprep.subr.bf16.mxu0 0
    %811 = vmatpush1.bf16.msra.mxu0 %v88
    %812 = vmatprep.subr.bf16.mxu0 0
    %813 = vmatpush1.bf16.msra.mxu0 0
    %814 = vmatprep.subr.bf16.mxu0 0
    %815 = vmatpush1.bf16.msra.mxu0 0
    %816 = vmatprep.subr.bf16.mxu0 0
    %817 = vmatpush1.bf16.msra.mxu0 0
    %818 = vmatprep.subr.bf16.mxu0 0
    %819 = vmatpush1.bf16.msra.mxu0 0
    %820 = vmatprep.subr.bf16.mxu0 0
    %821 = vmatpush1.bf16.msra.mxu0 0
    %822 = vmatprep.subr.bf16.mxu0 0
    %823 = vmatpush1.bf16.msra.mxu0 0
    %824 = vmatprep.subr.bf16.mxu0 0
    %825 = vmatpush1.bf16.msra.mxu0 0
    %826 = vmatprep.subr.bf16.mxu0 0
    %827 = vmatpush1.bf16.msra.mxu0 0
    %828 = vmatprep.subr.bf16.mxu0 0
    %829 = vmatpush1.bf16.msra.mxu0 0
    %830 = vmatprep.subr.bf16.mxu0 0
    %831 = vmatpush1.bf16.msra.mxu0 0
    %832 = vmatprep.subr.bf16.mxu0 0
    %833 = vmatpush1.bf16.msra.mxu0 0
    %834 = vmatprep.subr.bf16.mxu0 0
    %835 = vmatpush1.bf16.msra.mxu0 0
    %836 = vmatprep.subr.bf16.mxu0 0
    %837 = vmatpush1.bf16.msra.mxu0 0
    %838 = vmatprep.mubr.bf16.mxu0 0
    %839 = vmatmul.mubr.bf16.gmra.mrb[0].mxu0 %v804
    %v840 = vpop.f32.mrb[0].mxu0
    %v841 = vadd.f32 %v42, %v840
    %v842 = vpop.f32.mrb[0].mxu0
    %v843 = vpop.f32.mrb[0].mxu0
    %v844 = vpop.f32.mrb[0].mxu0
    %845 = vdwg.mxu0
    %v846 = vxor.u32 %v841, 2147483648
    %v847 = vmul.f32 %v846, 1.442695
    %v848 = vpow.pop %v847
    %v849 = vadd.f32 %v848, 1.0
    %v850 = vrcp.pop %v849
    %v851 = vmul.f32 1.0, %v850
    %v852 = vtanh.pop %v841
    %v853 = vmul.f32 %v851, %v774
    %855 = vrot.lane.b32.xlu0 %v852, 64
    %v856 = vpop.permute.xlu0 %855
    %v858 = vmul.f32 %v851, %v856
    %860 = vrot.lane.b32.xlu0 %v858, 32
    %v861 = vpop.permute.xlu0 %860
    %v863 = vadd.f32 %v853, %v861
    %v864 = vtanh.pop %v863
    %866 = vrot.lane.b32.xlu0 %v864, 64
    %v867 = vpop.permute.xlu0 %866
    %v869 = vmul.f32 %v851, %v867
    %v870 = vmul.f32 %v869, %v155
    %872 = vrot.lane.b32.xlu0 %v870, 32
    %v873 = vpop.permute.xlu0 %872
    %v875 = vsel %vm162, %v873, 0.0
    %876 = vadd.xlane.f32.xlu0 %v875
    %v877 = vpop.xlane.xlu0 %876
    %v878 = vadd.f32 %v877, %v49
    %v879 = vld [vmem:[%s0 + $0x9] sm:$0x1]
    %v880 = vld [vmem:[%s0 + $0x19] sm:$0x1]
    %v883 = vrot.slane %v880, 7
    %v884 = vsel %vm61, %v883, %v879
    %887 = vrot.lane.b32.xlu0 %v869, 40
    %v888 = vpop.permute.xlu0 %887
    %v890 = vsel %vm64, %v884, %v888
    %v891 = vpack.c.bf16 %v890, %v890
    %v893 = vsel %vm82, %v891, 0
    %895 = vmatprep.subr.bf16.mxu0 0
    %896 = vmatpush1.bf16.msra.mxu0 %v77
    %897 = vmatprep.subr.bf16.mxu0 0
    %898 = vmatpush1.bf16.msra.mxu0 %v78
    %899 = vmatprep.subr.bf16.mxu0 0
    %900 = vmatpush1.bf16.msra.mxu0 %v88
    %901 = vmatprep.subr.bf16.mxu0 0
    %902 = vmatpush1.bf16.msra.mxu0 0
    %903 = vmatprep.subr.bf16.mxu0 0
    %904 = vmatpush1.bf16.msra.mxu0 0
    %905 = vmatprep.subr.bf16.mxu0 0
    %906 = vmatpush1.bf16.msra.mxu0 0
    %907 = vmatprep.subr.bf16.mxu0 0
    %908 = vmatpush1.bf16.msra.mxu0 0
    %909 = vmatprep.subr.bf16.mxu0 0
    %910 = vmatpush1.bf16.msra.mxu0 0
    %911 = vmatprep.subr.bf16.mxu0 0
    %912 = vmatpush1.bf16.msra.mxu0 0
    %913 = vmatprep.subr.bf16.mxu0 0
    %914 = vmatpush1.bf16.msra.mxu0 0
    %915 = vmatprep.subr.bf16.mxu0 0
    %916 = vmatpush1.bf16.msra.mxu0 0
    %917 = vmatprep.subr.bf16.mxu0 0
    %918 = vmatpush1.bf16.msra.mxu0 0
    %919 = vmatprep.subr.bf16.mxu0 0
    %920 = vmatpush1.bf16.msra.mxu0 0
    %921 = vmatprep.subr.bf16.mxu0 0
    %922 = vmatpush1.bf16.msra.mxu0 0
    %923 = vmatprep.subr.bf16.mxu0 0
    %924 = vmatpush1.bf16.msra.mxu0 0
    %925 = vmatprep.subr.bf16.mxu0 0
    %926 = vmatpush1.bf16.msra.mxu0 0
    %927 = vmatprep.mubr.bf16.mxu0 0
    %928 = vmatmul.mubr.bf16.gmra.mrb[0].mxu0 %v893
    %v929 = vpop.f32.mrb[0].mxu0
    %v930 = vadd.f32 %v42, %v929
    %v931 = vpop.f32.mrb[0].mxu0
    %v932 = vpop.f32.mrb[0].mxu0
    %v933 = vpop.f32.mrb[0].mxu0
    %934 = vdwg.mxu0
    %v935 = vxor.u32 %v930, 2147483648
    %v936 = vmul.f32 %v935, 1.442695
    %v937 = vpow.pop %v936
    %v938 = vadd.f32 %v937, 1.0
    %v939 = vrcp.pop %v938
    %v940 = vmul.f32 1.0, %v939
    %v941 = vtanh.pop %v930
    %v942 = vmul.f32 %v940, %v863
    %944 = vrot.lane.b32.xlu0 %v941, 64
    %v945 = vpop.permute.xlu0 %944
    %v947 = vmul.f32 %v940, %v945
    %949 = vrot.lane.b32.xlu0 %v947, 32
    %v950 = vpop.permute.xlu0 %949
    %v952 = vadd.f32 %v942, %v950
    %v953 = vtanh.pop %v952
    %955 = vrot.lane.b32.xlu0 %v953, 64
    %v956 = vpop.permute.xlu0 %955
    %v958 = vmul.f32 %v940, %v956
    %v959 = vmul.f32 %v958, %v155
    %961 = vrot.lane.b32.xlu0 %v959, 32
    %v962 = vpop.permute.xlu0 %961
    %v964 = vsel %vm162, %v962, 0.0
    %965 = vadd.xlane.f32.xlu0 %v964
    %v966 = vpop.xlane.xlu0 %965
    %v967 = vadd.f32 %v966, %v49
    %v968 = vld [vmem:[%s0 + $0xa] sm:$0x1]
    %v969 = vld [vmem:[%s0 + $0x1a] sm:$0x1]
    %v972 = vrot.slane %v969, 7
    %v973 = vsel %vm61, %v972, %v968
    %976 = vrot.lane.b32.xlu0 %v958, 40
    %v977 = vpop.permute.xlu0 %976
    %v979 = vsel %vm64, %v973, %v977
    %v980 = vpack.c.bf16 %v979, %v979
    %v982 = vsel %vm82, %v980, 0
    %984 = vmatprep.subr.bf16.mxu0 0
    %985 = vmatpush1.bf16.msra.mxu0 %v77
    %986 = vmatprep.subr.bf16.mxu0 0
    %987 = vmatpush1.bf16.msra.mxu0 %v78
    %988 = vmatprep.subr.bf16.mxu0 0
    %989 = vmatpush1.bf16.msra.mxu0 %v88
    %990 = vmatprep.subr.bf16.mxu0 0
    %991 = vmatpush1.bf16.msra.mxu0 0
    %992 = vmatprep.subr.bf16.mxu0 0
    %993 = vmatpush1.bf16.msra.mxu0 0
    %994 = vmatprep.subr.bf16.mxu0 0
    %995 = vmatpush1.bf16.msra.mxu0 0
    %996 = vmatprep.subr.bf16.mxu0 0
    %997 = vmatpush1.bf16.msra.mxu0 0
    %998 = vmatprep.subr.bf16.mxu0 0
    %999 = vmatpush1.bf16.msra.mxu0 0
    %1000 = vmatprep.subr.bf16.mxu0 0
    %1001 = vmatpush1.bf16.msra.mxu0 0
    %1002 = vmatprep.subr.bf16.mxu0 0
    %1003 = vmatpush1.bf16.msra.mxu0 0
    %1004 = vmatprep.subr.bf16.mxu0 0
    %1005 = vmatpush1.bf16.msra.mxu0 0
    %1006 = vmatprep.subr.bf16.mxu0 0
    %1007 = vmatpush1.bf16.msra.mxu0 0
    %1008 = vmatprep.subr.bf16.mxu0 0
    %1009 = vmatpush1.bf16.msra.mxu0 0
    %1010 = vmatprep.subr.bf16.mxu0 0
    %1011 = vmatpush1.bf16.msra.mxu0 0
    %1012 = vmatprep.subr.bf16.mxu0 0
    %1013 = vmatpush1.bf16.msra.mxu0 0
    %1014 = vmatprep.subr.bf16.mxu0 0
    %1015 = vmatpush1.bf16.msra.mxu0 0
    %1016 = vmatprep.mubr.bf16.mxu0 0
    %1017 = vmatmul.mubr.bf16.gmra.mrb[0].mxu0 %v982
    %v1018 = vpop.f32.mrb[0].mxu0
    %v1019 = vadd.f32 %v42, %v1018
    %v1020 = vpop.f32.mrb[0].mxu0
    %v1021 = vpop.f32.mrb[0].mxu0
    %v1022 = vpop.f32.mrb[0].mxu0
    %1023 = vdwg.mxu0
    %v1024 = vxor.u32 %v1019, 2147483648
    %v1025 = vmul.f32 %v1024, 1.442695
    %v1026 = vpow.pop %v1025
    %v1027 = vadd.f32 %v1026, 1.0
    %v1028 = vrcp.pop %v1027
    %v1029 = vmul.f32 1.0, %v1028
    %v1030 = vtanh.pop %v1019
    %v1031 = vmul.f32 %v1029, %v952
    %1033 = vrot.lane.b32.xlu0 %v1030, 64
    %v1034 = vpop.permute.xlu0 %1033
    %v1036 = vmul.f32 %v1029, %v1034
    %1038 = vrot.lane.b32.xlu0 %v1036, 32
    %v1039 = vpop.permute.xlu0 %1038
    %v1041 = vadd.f32 %v1031, %v1039
    %v1042 = vtanh.pop %v1041
    %1044 = vrot.lane.b32.xlu0 %v1042, 64
    %v1045 = vpop.permute.xlu0 %1044
    %v1047 = vmul.f32 %v1029, %v1045
    %v1048 = vmul.f32 %v1047, %v155
    %1050 = vrot.lane.b32.xlu0 %v1048, 32
    %v1051 = vpop.permute.xlu0 %1050
    %v1053 = vsel %vm162, %v1051, 0.0
    %1054 = vadd.xlane.f32.xlu0 %v1053
    %v1055 = vpop.xlane.xlu0 %1054
    %v1056 = vadd.f32 %v1055, %v49
    %v1057 = vld [vmem:[%s0 + $0xb] sm:$0x1]
    %v1058 = vld [vmem:[%s0 + $0x1b] sm:$0x1]
    %v1061 = vrot.slane %v1058, 7
    %v1062 = vsel %vm61, %v1061, %v1057
    %1065 = vrot.lane.b32.xlu0 %v1047, 40
    %v1066 = vpop.permute.xlu0 %1065
    %v1068 = vsel %vm64, %v1062, %v1066
    %v1069 = vpack.c.bf16 %v1068, %v1068
    %v1071 = vsel %vm82, %v1069, 0
    %1073 = vmatprep.subr.bf16.mxu0 0
    %1074 = vmatpush1.bf16.msra.mxu0 %v77
    %1075 = vmatprep.subr.bf16.mxu0 0
    %1076 = vmatpush1.bf16.msra.mxu0 %v78
    %1077 = vmatprep.subr.bf16.mxu0 0
    %1078 = vmatpush1.bf16.msra.mxu0 %v88
    %1079 = vmatprep.subr.bf16.mxu0 0
    %1080 = vmatpush1.bf16.msra.mxu0 0
    %1081 = vmatprep.subr.bf16.mxu0 0
    %1082 = vmatpush1.bf16.msra.mxu0 0
    %1083 = vmatprep.subr.bf16.mxu0 0
    %1084 = vmatpush1.bf16.msra.mxu0 0
    %1085 = vmatprep.subr.bf16.mxu0 0
    %1086 = vmatpush1.bf16.msra.mxu0 0
    %1087 = vmatprep.subr.bf16.mxu0 0
    %1088 = vmatpush1.bf16.msra.mxu0 0
    %1089 = vmatprep.subr.bf16.mxu0 0
    %1090 = vmatpush1.bf16.msra.mxu0 0
    %1091 = vmatprep.subr.bf16.mxu0 0
    %1092 = vmatpush1.bf16.msra.mxu0 0
    %1093 = vmatprep.subr.bf16.mxu0 0
    %1094 = vmatpush1.bf16.msra.mxu0 0
    %1095 = vmatprep.subr.bf16.mxu0 0
    %1096 = vmatpush1.bf16.msra.mxu0 0
    %1097 = vmatprep.subr.bf16.mxu0 0
    %1098 = vmatpush1.bf16.msra.mxu0 0
    %1099 = vmatprep.subr.bf16.mxu0 0
    %1100 = vmatpush1.bf16.msra.mxu0 0
    %1101 = vmatprep.subr.bf16.mxu0 0
    %1102 = vmatpush1.bf16.msra.mxu0 0
    %1103 = vmatprep.subr.bf16.mxu0 0
    %1104 = vmatpush1.bf16.msra.mxu0 0
    %1105 = vmatprep.mubr.bf16.mxu0 0
    %1106 = vmatmul.mubr.bf16.gmra.mrb[0].mxu0 %v1071
    %v1107 = vpop.f32.mrb[0].mxu0
    %v1108 = vadd.f32 %v42, %v1107
    %v1109 = vpop.f32.mrb[0].mxu0
    %v1110 = vpop.f32.mrb[0].mxu0
    %v1111 = vpop.f32.mrb[0].mxu0
    %1112 = vdwg.mxu0
    %v1113 = vxor.u32 %v1108, 2147483648
    %v1114 = vmul.f32 %v1113, 1.442695
    %v1115 = vpow.pop %v1114
    %v1116 = vadd.f32 %v1115, 1.0
    %v1117 = vrcp.pop %v1116
    %v1118 = vmul.f32 1.0, %v1117
    %v1119 = vtanh.pop %v1108
    %v1120 = vmul.f32 %v1118, %v1041
    %1122 = vrot.lane.b32.xlu0 %v1119, 64
    %v1123 = vpop.permute.xlu0 %1122
    %v1125 = vmul.f32 %v1118, %v1123
    %1127 = vrot.lane.b32.xlu0 %v1125, 32
    %v1128 = vpop.permute.xlu0 %1127
    %v1130 = vadd.f32 %v1120, %v1128
    %v1131 = vtanh.pop %v1130
    %1133 = vrot.lane.b32.xlu0 %v1131, 64
    %v1134 = vpop.permute.xlu0 %1133
    %v1136 = vmul.f32 %v1118, %v1134
    %v1137 = vmul.f32 %v1136, %v155
    %1139 = vrot.lane.b32.xlu0 %v1137, 32
    %v1140 = vpop.permute.xlu0 %1139
    %v1142 = vsel %vm162, %v1140, 0.0
    %1143 = vadd.xlane.f32.xlu0 %v1142
    %v1144 = vpop.xlane.xlu0 %1143
    %v1145 = vadd.f32 %v1144, %v49
    %v1146 = vlaneseq
    %v1147 = vand.u32 %v1146, 127
    %vm1148 = vcmp.eq.s32.totalorder %v1147, 0
    %vm1149 = vcmp.eq.s32.totalorder %v1147, 4
    %vm1150 = vcmp.eq.s32.totalorder %v1147, 5
    %vm1151 = vcmp.eq.s32.totalorder %v1147, 6
    %vm1152 = vcmp.eq.s32.totalorder %v1147, 7
    %v1153 = vld [vmem:[%s1] sm:$0x3]
    %v1154 = vld [vmem:[%s0 + $0xc] sm:$0x1]
    %v1155 = vld [vmem:[%s0 + $0x1c] sm:$0x1]
    %1157 = vset.pattern.permute.xlu0 0
    %1158 = vperm.xlu0 %1157, %v1145
    %v1159 = vpop.permute.xlu0 %1158
    %v1163 = vrot.slane %v1155, 7
    %v1164 = vsel %vm61, %v1163, %v1154
    %v1166 = vsel %vm1148, %v1159, %v1164
    %1168 = vset.pattern.permute.xlu0 0
    %1169 = vperm.xlu0 %1168, %v1153
    %v1170 = vpop.permute.xlu0 %1169
    %v1172 = vsel %vm1149, %v1170, %v1166
    %1173 = vset.pattern.permute.xlu0 1
    %1174 = vperm.xlu0 %1173, %v1153
    %v1175 = vpop.permute.xlu0 %1174
    %v1177 = vsel %vm1150, %v1175, %v1172
    %1178 = vset.pattern.permute.xlu0 3
    %1179 = vperm.xlu0 %1178, %v1153
    %v1180 = vpop.permute.xlu0 %1179
    %v1182 = vsel %vm1151, %v1180, %v1177
    %1183 = vset.pattern.permute.xlu0 6
    %1184 = vperm.xlu0 %1183, %v1153
    %v1185 = vpop.permute.xlu0 %1184
    %v1187 = vsel %vm1152, %v1185, %v1182
    %1189 = vrot.lane.b32.xlu0 %v1136, 40
    %v1190 = vpop.permute.xlu0 %1189
    %v1192 = vsel %vm64, %v1187, %v1190
    %v1193 = vpack.c.bf16 %v1192, %v1192
    %v1195 = vsel %vm82, %v1193, 0
    %1197 = vmatprep.subr.bf16.mxu0 0
    %1198 = vmatpush1.bf16.msra.mxu0 %v77
    %1199 = vmatprep.subr.bf16.mxu0 0
    %1200 = vmatpush1.bf16.msra.mxu0 %v78
    %1201 = vmatprep.subr.bf16.mxu0 0
    %1202 = vmatpush1.bf16.msra.mxu0 %v88
    %1203 = vmatprep.subr.bf16.mxu0 0
    %1204 = vmatpush1.bf16.msra.mxu0 0
    %1205 = vmatprep.subr.bf16.mxu0 0
    %1206 = vmatpush1.bf16.msra.mxu0 0
    %1207 = vmatprep.subr.bf16.mxu0 0
    %1208 = vmatpush1.bf16.msra.mxu0 0
    %1209 = vmatprep.subr.bf16.mxu0 0
    %1210 = vmatpush1.bf16.msra.mxu0 0
    %1211 = vmatprep.subr.bf16.mxu0 0
    %1212 = vmatpush1.bf16.msra.mxu0 0
    %1213 = vmatprep.subr.bf16.mxu0 0
    %1214 = vmatpush1.bf16.msra.mxu0 0
    %1215 = vmatprep.subr.bf16.mxu0 0
    %1216 = vmatpush1.bf16.msra.mxu0 0
    %1217 = vmatprep.subr.bf16.mxu0 0
    %1218 = vmatpush1.bf16.msra.mxu0 0
    %1219 = vmatprep.subr.bf16.mxu0 0
    %1220 = vmatpush1.bf16.msra.mxu0 0
    %1221 = vmatprep.subr.bf16.mxu0 0
    %1222 = vmatpush1.bf16.msra.mxu0 0
    %1223 = vmatprep.subr.bf16.mxu0 0
    %1224 = vmatpush1.bf16.msra.mxu0 0
    %1225 = vmatprep.subr.bf16.mxu0 0
    %1226 = vmatpush1.bf16.msra.mxu0 0
    %1227 = vmatprep.subr.bf16.mxu0 0
    %1228 = vmatpush1.bf16.msra.mxu0 0
    %1229 = vmatprep.mubr.bf16.mxu0 0
    %1230 = vmatmul.mubr.bf16.gmra.mrb[0].mxu0 %v1195
    %v1231 = vpop.f32.mrb[0].mxu0
    %v1232 = vadd.f32 %v42, %v1231
    %v1233 = vpop.f32.mrb[0].mxu0
    %v1234 = vpop.f32.mrb[0].mxu0
    %v1235 = vpop.f32.mrb[0].mxu0
    %1236 = vdwg.mxu0
    %v1237 = vxor.u32 %v1232, 2147483648
    %v1238 = vmul.f32 %v1237, 1.442695
    %v1239 = vpow.pop %v1238
    %v1240 = vadd.f32 %v1239, 1.0
    %v1241 = vrcp.pop %v1240
    %v1242 = vmul.f32 1.0, %v1241
    %v1243 = vtanh.pop %v1232
    %v1244 = vmul.f32 %v1242, %v1130
    %1246 = vrot.lane.b32.xlu0 %v1243, 64
    %v1247 = vpop.permute.xlu0 %1246
    %v1249 = vmul.f32 %v1242, %v1247
    %1251 = vrot.lane.b32.xlu0 %v1249, 32
    %v1252 = vpop.permute.xlu0 %1251
    %v1254 = vadd.f32 %v1244, %v1252
    %v1255 = vtanh.pop %v1254
    %1257 = vrot.lane.b32.xlu0 %v1255, 64
    %v1258 = vpop.permute.xlu0 %1257
    %v1260 = vmul.f32 %v1242, %v1258
    %v1261 = vmul.f32 %v1260, %v155
    %1263 = vrot.lane.b32.xlu0 %v1261, 32
    %v1264 = vpop.permute.xlu0 %1263
    %v1266 = vsel %vm162, %v1264, 0.0
    %1267 = vadd.xlane.f32.xlu0 %v1266
    %v1268 = vpop.xlane.xlu0 %1267
    %v1269 = vadd.f32 %v1268, %v49
    %v1270 = vld [vmem:[%s0 + $0xd] sm:$0x1]
    %v1271 = vld [vmem:[%s0 + $0x1d] sm:$0x1]
    %1273 = vset.pattern.permute.xlu0 0
    %1274 = vperm.xlu0 %1273, %v1269
    %v1275 = vpop.permute.xlu0 %1274
    %v1279 = vrot.slane %v1271, 7
    %v1280 = vsel %vm61, %v1279, %v1270
    %v1282 = vsel %vm1148, %v1275, %v1280
    %v1283 = vsel %vm1149, %v1159, %v1282
    %v1284 = vsel %vm1150, %v1170, %v1283
    %1285 = vset.pattern.permute.xlu0 2
    %1286 = vperm.xlu0 %1285, %v1153
    %v1287 = vpop.permute.xlu0 %1286
    %v1289 = vsel %vm1151, %v1287, %v1284
    %1290 = vset.pattern.permute.xlu0 5
    %1291 = vperm.xlu0 %1290, %v1153
    %v1292 = vpop.permute.xlu0 %1291
    %v1294 = vsel %vm1152, %v1292, %v1289
    %1296 = vrot.lane.b32.xlu0 %v1260, 40
    %v1297 = vpop.permute.xlu0 %1296
    %v1299 = vsel %vm64, %v1294, %v1297
    %v1300 = vpack.c.bf16 %v1299, %v1299
    %v1302 = vsel %vm82, %v1300, 0
    %1304 = vmatprep.subr.bf16.mxu0 0
    %1305 = vmatpush1.bf16.msra.mxu0 %v77
    %1306 = vmatprep.subr.bf16.mxu0 0
    %1307 = vmatpush1.bf16.msra.mxu0 %v78
    %1308 = vmatprep.subr.bf16.mxu0 0
    %1309 = vmatpush1.bf16.msra.mxu0 %v88
    %1310 = vmatprep.subr.bf16.mxu0 0
    %1311 = vmatpush1.bf16.msra.mxu0 0
    %1312 = vmatprep.subr.bf16.mxu0 0
    %1313 = vmatpush1.bf16.msra.mxu0 0
    %1314 = vmatprep.subr.bf16.mxu0 0
    %1315 = vmatpush1.bf16.msra.mxu0 0
    %1316 = vmatprep.subr.bf16.mxu0 0
    %1317 = vmatpush1.bf16.msra.mxu0 0
    %1318 = vmatprep.subr.bf16.mxu0 0
    %1319 = vmatpush1.bf16.msra.mxu0 0
    %1320 = vmatprep.subr.bf16.mxu0 0
    %1321 = vmatpush1.bf16.msra.mxu0 0
    %1322 = vmatprep.subr.bf16.mxu0 0
    %1323 = vmatpush1.bf16.msra.mxu0 0
    %1324 = vmatprep.subr.bf16.mxu0 0
    %1325 = vmatpush1.bf16.msra.mxu0 0
    %1326 = vmatprep.subr.bf16.mxu0 0
    %1327 = vmatpush1.bf16.msra.mxu0 0
    %1328 = vmatprep.subr.bf16.mxu0 0
    %1329 = vmatpush1.bf16.msra.mxu0 0
    %1330 = vmatprep.subr.bf16.mxu0 0
    %1331 = vmatpush1.bf16.msra.mxu0 0
    %1332 = vmatprep.subr.bf16.mxu0 0
    %1333 = vmatpush1.bf16.msra.mxu0 0
    %1334 = vmatprep.subr.bf16.mxu0 0
    %1335 = vmatpush1.bf16.msra.mxu0 0
    %1336 = vmatprep.mubr.bf16.mxu0 0
    %1337 = vmatmul.mubr.bf16.gmra.mrb[0].mxu0 %v1302
    %v1338 = vpop.f32.mrb[0].mxu0
    %v1339 = vadd.f32 %v42, %v1338
    %v1340 = vpop.f32.mrb[0].mxu0
    %v1341 = vpop.f32.mrb[0].mxu0
    %v1342 = vpop.f32.mrb[0].mxu0
    %1343 = vdwg.mxu0
    %v1344 = vxor.u32 %v1339, 2147483648
    %v1345 = vmul.f32 %v1344, 1.442695
    %v1346 = vpow.pop %v1345
    %v1347 = vadd.f32 %v1346, 1.0
    %v1348 = vrcp.pop %v1347
    %v1349 = vmul.f32 1.0, %v1348
    %v1350 = vtanh.pop %v1339
    %v1351 = vmul.f32 %v1349, %v1254
    %1353 = vrot.lane.b32.xlu0 %v1350, 64
    %v1354 = vpop.permute.xlu0 %1353
    %v1356 = vmul.f32 %v1349, %v1354
    %1358 = vrot.lane.b32.xlu0 %v1356, 32
    %v1359 = vpop.permute.xlu0 %1358
    %v1361 = vadd.f32 %v1351, %v1359
    %v1362 = vtanh.pop %v1361
    %1364 = vrot.lane.b32.xlu0 %v1362, 64
    %v1365 = vpop.permute.xlu0 %1364
    %v1367 = vmul.f32 %v1349, %v1365
    %v1368 = vmul.f32 %v1367, %v155
    %1370 = vrot.lane.b32.xlu0 %v1368, 32
    %v1371 = vpop.permute.xlu0 %1370
    %v1373 = vsel %vm162, %v1371, 0.0
    %1374 = vadd.xlane.f32.xlu0 %v1373
    %v1375 = vpop.xlane.xlu0 %1374
    %v1376 = vadd.f32 %v1375, %v49
    %v1377 = vld [vmem:[%s0 + $0xe] sm:$0x1]
    %v1378 = vld [vmem:[%s0 + $0x1e] sm:$0x1]
    %1380 = vset.pattern.permute.xlu0 0
    %1381 = vperm.xlu0 %1380, %v1376
    %v1382 = vpop.permute.xlu0 %1381
    %v1386 = vrot.slane %v1378, 7
    %v1387 = vsel %vm61, %v1386, %v1377
    %v1389 = vsel %vm1148, %v1382, %v1387
    %v1390 = vsel %vm1149, %v1275, %v1389
    %v1391 = vsel %vm1150, %v1159, %v1390
    %v1392 = vsel %vm1151, %v1175, %v1391
    %1393 = vset.pattern.permute.xlu0 4
    %1394 = vperm.xlu0 %1393, %v1153
    %v1395 = vpop.permute.xlu0 %1394
    %v1397 = vsel %vm1152, %v1395, %v1392
    %1399 = vrot.lane.b32.xlu0 %v1367, 40
    %v1400 = vpop.permute.xlu0 %1399
    %v1402 = vsel %vm64, %v1397, %v1400
    %v1403 = vpack.c.bf16 %v1402, %v1402
    %v1405 = vsel %vm82, %v1403, 0
    %1407 = vmatprep.subr.bf16.mxu0 0
    %1408 = vmatpush1.bf16.msra.mxu0 %v77
    %1409 = vmatprep.subr.bf16.mxu0 0
    %1410 = vmatpush1.bf16.msra.mxu0 %v78
    %1411 = vmatprep.subr.bf16.mxu0 0
    %1412 = vmatpush1.bf16.msra.mxu0 %v88
    %1413 = vmatprep.subr.bf16.mxu0 0
    %1414 = vmatpush1.bf16.msra.mxu0 0
    %1415 = vmatprep.subr.bf16.mxu0 0
    %1416 = vmatpush1.bf16.msra.mxu0 0
    %1417 = vmatprep.subr.bf16.mxu0 0
    %1418 = vmatpush1.bf16.msra.mxu0 0
    %1419 = vmatprep.subr.bf16.mxu0 0
    %1420 = vmatpush1.bf16.msra.mxu0 0
    %1421 = vmatprep.subr.bf16.mxu0 0
    %1422 = vmatpush1.bf16.msra.mxu0 0
    %1423 = vmatprep.subr.bf16.mxu0 0
    %1424 = vmatpush1.bf16.msra.mxu0 0
    %1425 = vmatprep.subr.bf16.mxu0 0
    %1426 = vmatpush1.bf16.msra.mxu0 0
    %1427 = vmatprep.subr.bf16.mxu0 0
    %1428 = vmatpush1.bf16.msra.mxu0 0
    %1429 = vmatprep.subr.bf16.mxu0 0
    %1430 = vmatpush1.bf16.msra.mxu0 0
    %1431 = vmatprep.subr.bf16.mxu0 0
    %1432 = vmatpush1.bf16.msra.mxu0 0
    %1433 = vmatprep.subr.bf16.mxu0 0
    %1434 = vmatpush1.bf16.msra.mxu0 0
    %1435 = vmatprep.subr.bf16.mxu0 0
    %1436 = vmatpush1.bf16.msra.mxu0 0
    %1437 = vmatprep.subr.bf16.mxu0 0
    %1438 = vmatpush1.bf16.msra.mxu0 0
    %1439 = vmatprep.mubr.bf16.mxu0 0
    %1440 = vmatmul.mubr.bf16.gmra.mrb[0].mxu0 %v1405
    %v1441 = vpop.f32.mrb[0].mxu0
    %v1442 = vadd.f32 %v42, %v1441
    %v1443 = vpop.f32.mrb[0].mxu0
    %v1444 = vpop.f32.mrb[0].mxu0
    %v1445 = vpop.f32.mrb[0].mxu0
    %1446 = vdwg.mxu0
    %v1447 = vxor.u32 %v1442, 2147483648
    %v1448 = vmul.f32 %v1447, 1.442695
    %v1449 = vpow.pop %v1448
    %v1450 = vadd.f32 %v1449, 1.0
    %v1451 = vrcp.pop %v1450
    %v1452 = vmul.f32 1.0, %v1451
    %v1453 = vtanh.pop %v1442
    %v1454 = vmul.f32 %v1452, %v1361
    %1456 = vrot.lane.b32.xlu0 %v1453, 64
    %v1457 = vpop.permute.xlu0 %1456
    %v1459 = vmul.f32 %v1452, %v1457
    %1461 = vrot.lane.b32.xlu0 %v1459, 32
    %v1462 = vpop.permute.xlu0 %1461
    %v1464 = vadd.f32 %v1454, %v1462
    %v1465 = vtanh.pop %v1464
    %1467 = vrot.lane.b32.xlu0 %v1465, 64
    %v1468 = vpop.permute.xlu0 %1467
    %v1470 = vmul.f32 %v1452, %v1468
    %v1471 = vmul.f32 %v1470, %v155
    %1473 = vrot.lane.b32.xlu0 %v1471, 32
    %v1474 = vpop.permute.xlu0 %1473
    %v1476 = vsel %vm162, %v1474, 0.0
    %1477 = vadd.xlane.f32.xlu0 %v1476
    %v1478 = vpop.xlane.xlu0 %1477
    %v1479 = vadd.f32 %v1478, %v49
    %v1480 = vld [vmem:[%s0 + $0xf] sm:$0x1]
    %v1481 = vld [vmem:[%s0 + $0x1f] sm:$0x1]
    %1483 = vset.pattern.permute.xlu0 0
    %1484 = vperm.xlu0 %1483, %v1479
    %v1485 = vpop.permute.xlu0 %1484
    %v1489 = vrot.slane %v1481, 7
    %v1490 = vsel %vm61, %v1489, %v1480
    %v1492 = vsel %vm1148, %v1485, %v1490
    %v1493 = vsel %vm1149, %v1382, %v1492
    %v1494 = vsel %vm1150, %v1275, %v1493
    %v1495 = vsel %vm1151, %v1170, %v1494
    %v1496 = vsel %vm1152, %v1180, %v1495
    %1498 = vrot.lane.b32.xlu0 %v1470, 40
    %v1499 = vpop.permute.xlu0 %1498
    %v1501 = vsel %vm64, %v1496, %v1499
    %v1502 = vpack.c.bf16 %v1501, %v1501
    %v1504 = vsel %vm82, %v1502, 0
    %1506 = vmatprep.subr.bf16.mxu0 0
    %1507 = vmatpush1.bf16.msra.mxu0 %v77
    %1508 = vmatprep.subr.bf16.mxu0 0
    %1509 = vmatpush1.bf16.msra.mxu0 %v78
    %1510 = vmatprep.subr.bf16.mxu0 0
    %1511 = vmatpush1.bf16.msra.mxu0 %v88
    %1512 = vmatprep.subr.bf16.mxu0 0
    %1513 = vmatpush1.bf16.msra.mxu0 0
    %1514 = vmatprep.subr.bf16.mxu0 0
    %1515 = vmatpush1.bf16.msra.mxu0 0
    %1516 = vmatprep.subr.bf16.mxu0 0
    %1517 = vmatpush1.bf16.msra.mxu0 0
    %1518 = vmatprep.subr.bf16.mxu0 0
    %1519 = vmatpush1.bf16.msra.mxu0 0
    %1520 = vmatprep.subr.bf16.mxu0 0
    %1521 = vmatpush1.bf16.msra.mxu0 0
    %1522 = vmatprep.subr.bf16.mxu0 0
    %1523 = vmatpush1.bf16.msra.mxu0 0
    %1524 = vmatprep.subr.bf16.mxu0 0
    %1525 = vmatpush1.bf16.msra.mxu0 0
    %1526 = vmatprep.subr.bf16.mxu0 0
    %1527 = vmatpush1.bf16.msra.mxu0 0
    %1528 = vmatprep.subr.bf16.mxu0 0
    %1529 = vmatpush1.bf16.msra.mxu0 0
    %1530 = vmatprep.subr.bf16.mxu0 0
    %1531 = vmatpush1.bf16.msra.mxu0 0
    %1532 = vmatprep.subr.bf16.mxu0 0
    %1533 = vmatpush1.bf16.msra.mxu0 0
    %1534 = vmatprep.subr.bf16.mxu0 0
    %1535 = vmatpush1.bf16.msra.mxu0 0
    %1536 = vmatprep.subr.bf16.mxu0 0
    %1537 = vmatpush1.bf16.msra.mxu0 0
    %1538 = vmatprep.mubr.bf16.mxu0 0
    %1539 = vmatmul.mubr.bf16.gmra.mrb[0].mxu0 %v1504
    %v1540 = vpop.f32.mrb[0].mxu0
    %v1541 = vadd.f32 %v42, %v1540
    %v1542 = vpop.f32.mrb[0].mxu0
    %v1543 = vpop.f32.mrb[0].mxu0
    %v1544 = vpop.f32.mrb[0].mxu0
    %1545 = vdwg.mxu0
    %v1546 = vxor.u32 %v1541, 2147483648
    %v1547 = vmul.f32 %v1546, 1.442695
    %v1548 = vpow.pop %v1547
    %v1549 = vadd.f32 %v1548, 1.0
    %v1550 = vrcp.pop %v1549
    %v1551 = vmul.f32 1.0, %v1550
    %v1552 = vtanh.pop %v1541
    %v1553 = vmul.f32 %v1551, %v1464
    %1555 = vrot.lane.b32.xlu0 %v1552, 64
    %v1556 = vpop.permute.xlu0 %1555
    %v1558 = vmul.f32 %v1551, %v1556
    %1560 = vrot.lane.b32.xlu0 %v1558, 32
    %v1561 = vpop.permute.xlu0 %1560
    %v1563 = vadd.f32 %v1553, %v1561
    %v1564 = vtanh.pop %v1563
    %1566 = vrot.lane.b32.xlu0 %v1564, 64
    %v1567 = vpop.permute.xlu0 %1566
    %v1569 = vmul.f32 %v1551, %v1567
    %v1570 = vmul.f32 %v1569, %v155
    %1572 = vrot.lane.b32.xlu0 %v1570, 32
    %v1573 = vpop.permute.xlu0 %1572
    %v1575 = vsel %vm162, %v1573, 0.0
    %1576 = vadd.xlane.f32.xlu0 %v1575
    %v1577 = vpop.xlane.xlu0 %1576
    %v1578 = vadd.f32 %v1577, %v49
    %1580 = vrot.lane.b32.xlu0 %v255, 1
    %v1581 = vpop.permute.xlu0 %1580
    %1584 = vrot.lane.b32.xlu0 %v344, 2
    %v1585 = vpop.permute.xlu0 %1584
    %1588 = vrot.lane.b32.xlu0 %v433, 3
    %v1589 = vpop.permute.xlu0 %1588
    %1592 = vrot.lane.b32.xlu0 %v522, 4
    %v1593 = vpop.permute.xlu0 %1592
    %1596 = vrot.lane.b32.xlu0 %v611, 5
    %v1597 = vpop.permute.xlu0 %1596
    %1600 = vrot.lane.b32.xlu0 %v700, 6
    %v1601 = vpop.permute.xlu0 %1600
    %1604 = vrot.lane.b32.xlu0 %v789, 7
    %v1605 = vpop.permute.xlu0 %1604
    %1608 = vrot.lane.b32.xlu0 %v878, 8
    %v1609 = vpop.permute.xlu0 %1608
    %1612 = vrot.lane.b32.xlu0 %v967, 9
    %v1613 = vpop.permute.xlu0 %1612
    %1616 = vrot.lane.b32.xlu0 %v1056, 10
    %v1617 = vpop.permute.xlu0 %1616
    %1619 = vrot.lane.b32.xlu0 %v1145, 11
    %v1620 = vpop.permute.xlu0 %1619
    %1622 = vrot.lane.b32.xlu0 %v1269, 12
    %v1623 = vpop.permute.xlu0 %1622
    %1625 = vrot.lane.b32.xlu0 %v1376, 13
    %v1626 = vpop.permute.xlu0 %1625
    %1628 = vrot.lane.b32.xlu0 %v1479, 14
    %v1629 = vpop.permute.xlu0 %1628
    %1632 = vrot.lane.b32.xlu0 %v1578, 15
    %v1633 = vpop.permute.xlu0 %1632
    %vm1635 = vcmask 7168
    %v1636 = vsel %vm1635, %v166, %v1581
    %vm1637 = vcmask 15360
    %v1638 = vsel %vm1637, %v1636, %v1585
    %vm1639 = vcmask 23552
    %v1640 = vsel %vm1639, %v1638, %v1589
    %vm1641 = vcmask 31744
    %v1642 = vsel %vm1641, %v1640, %v1593
    %vm1643 = vcmask 39936
    %v1644 = vsel %vm1643, %v1642, %v1597
    %vm1645 = vcmask 48128
    %v1646 = vsel %vm1645, %v1644, %v1601
    %vm1647 = vcmask 56320
    %v1648 = vsel %vm1647, %v1646, %v1605
    %v1649 = vsel %vm64, %v1648, %v1609
    %vm1650 = vcmask 72704
    %v1651 = vsel %vm1650, %v1649, %v1613
    %vm1652 = vcmask 80896
    %v1653 = vsel %vm1652, %v1651, %v1617
    %vm1654 = vcmask 89088
    %v1655 = vsel %vm1654, %v1653, %v1620
    %vm1656 = vcmask 97280
    %v1657 = vsel %vm1656, %v1655, %v1623
    %vm1658 = vcmask 105472
    %v1659 = vsel %vm1658, %v1657, %v1626
    %vm1660 = vcmask 113664
    %v1661 = vsel %vm1660, %v1659, %v1629
    %vm1662 = vcmask 121856
    %v1663 = vsel %vm1662, %v1661, %v1633
    %vm1664 = vcmask 130048
    %v1665 = vsel %vm1664, %v1663, 0.0
    %1667 = vset.pattern.permute.xlu0 0
    %1668 = vperm.xlu0 %1667, %v36
    %v1669 = vpop.permute.xlu0 %1668
    %v1671 = vmul.f32 %v1665, %v1669
    %1672 = vst [vmem:[#allocation3] sm:$0x3] %v1671
    // Predicated region
    $region30: #{tpu_custom_call.1} parent=1 // pred_check
      _
    $region31: #{tpu_custom_call.1} parent=1 // pred_check_branch
      %1674 = sbr.rel (0) target = $region33
    $region32: #{tpu_custom_call.1} parent=1 // pred_region
      %s1676 = ssub.s32 32, 32
      %1677 = vsyncadd [#allocation4], %s1676
      %s1679 = sshll.u32 [#allocation3], 4
      %s1680 = int_to_ptr.vmem [resolvable:$true] %s1679
      %1682 = dma.vmem_to_hbm [thread:$0]  %s1680, 32, %s7, [#allocation4]
    $region33: #{tpu_custom_call.1} parent=1 // pred_fallthru
      _
    // Predicated region
    $region34: #{tpu_custom_call.1} parent=1 // pred_check
      _
    $region35: #{tpu_custom_call.1} parent=1 // pred_check_branch
      %1684 = sbr.rel (0) target = $region37
    $region36: #{tpu_custom_call.1} parent=1 // pred_region
      %1685 = dma.done [#allocation4], 32
    $region37: #{tpu_custom_call.1} parent=1 // pred_fallthru
      _
    %1686 = vsyncpa [#allocation4], 1

</llo_original>
